<compile_context>
chip_gen: v7x
topology: tpu7x:2x2x1
jax: 0.10.0
libtpu: 0.0.40
codegen_flags: <defaults>
</compile_context>

<pallas_src>
import jax
import jax.numpy as jnp
from jax import lax
from jax.experimental import pallas as pl
from jax.experimental.pallas import tpu as pltpu


# --------------------------------------------------------------------------- #
# Kernel
# --------------------------------------------------------------------------- #
def _make_bidir_kernel(n_parts, Tc, B, H):
    """Fused forward+backward LSTM layer, one time chunk per grid step.

    Ref layout (inputs, outputs, scratch):
      x refs         : 2*n_parts of (Tc*B, Dp) bf16   (fwd chunk, bwd chunk per part)
      wih refs       : n_parts of (2, Dp, 4H) bf16
      whh_ref        : (2, H, 4H) bf16
      b_ref          : (2, 1, 4H) f32                 (b_ih + b_hh, per direction)
      yf_ref, yb_ref : (Tc, B, H) bf16
      scratch        : h_f, c_f, h_b, c_b (B, H) f32 ; xg_f, xg_b (Tc, B, 4H) f32
    """

    def kernel(*refs):
        x_refs = refs[:2 * n_parts]
        wih_refs = refs[2 * n_parts:3 * n_parts]
        whh_ref, b_ref, yf_ref, yb_ref = refs[3 * n_parts:3 * n_parts + 4]
        hf_sc, cf_sc, hb_sc, cb_sc, xgf_sc, xgb_sc = refs[3 * n_parts + 4:]

        @pl.when(pl.program_id(0) == 0)
        def _():
            hf_sc[...] = jnp.zeros_like(hf_sc)
            cf_sc[...] = jnp.zeros_like(cf_sc)
            hb_sc[...] = jnp.zeros_like(hb_sc)
            cb_sc[...] = jnp.zeros_like(cb_sc)

        # Hoisted input projection for both directions: big bf16 MXU matmuls with
        # f32 accumulation, bias folded in once per chunk.  x arrives flattened
        # (Tc*B, Dp) from the wrapper, so no in-kernel repack of the operand.
        xg_f = b_ref[0]
        xg_b = b_ref[1]
        for p in range(n_parts):
            xg_f = xg_f + jnp.dot(x_refs[2 * p][...], wih_refs[p][0],
                                  preferred_element_type=jnp.float32)
            xg_b = xg_b + jnp.dot(x_refs[2 * p + 1][...], wih_refs[p][1],
                                  preferred_element_type=jnp.float32)
        # B is padded to a multiple of 8 by the wrapper, so this split of the
        # leading (Tc*B) axis is sublane-aligned (no data movement).
        xgf_sc[...] = xg_f.reshape(Tc, B, 4 * H)
        xgb_sc[...] = xg_b.reshape(Tc, B, 4 * H)

        whh_f = whh_ref[0]          # (H, 4H) bf16, loaded once per chunk
        whh_b = whh_ref[1]

        def cell(g, c_prev):
            # Sigmoid only on i, f, o; tanh only on g.  (gate order i, f, g, o)
            i_f = jax.nn.sigmoid(g[:, :2 * H])
            o = jax.nn.sigmoid(g[:, 3 * H:])
            gg = jnp.tanh(g[:, 2 * H:3 * H])
            c = i_f[:, H:] * c_prev + i_f[:, :H] * gg
            h = o * jnp.tanh(c)
            return h, c

        def step(s, carry):
            # Two independent recurrences (forward and backward) interleaved in one
            # body: the two chains hide MXU / EUP latency behind each other.
            h_f, c_f, h_b, c_b = carry
            sb = Tc - 1 - s
            g_f = xgf_sc[s] + jnp.dot(h_f.astype(jnp.bfloat16), whh_f,
                                      preferred_element_type=jnp.float32)
            g_b = xgb_sc[sb] + jnp.dot(h_b.astype(jnp.bfloat16), whh_b,
                                       preferred_element_type=jnp.float32)
            h_f, c_f = cell(g_f, c_f)
            h_b, c_b = cell(g_b, c_b)
            yf_ref[s] = h_f.astype(yf_ref.dtype)
            yb_ref[sb] = h_b.astype(yb_ref.dtype)
            return (h_f, c_f, h_b, c_b)

        # Carry (h, c) in registers through the loop; the VMEM state scratch is
        # read once before and written once after (it only needs to persist
        # across time chunks, i.e. across grid steps).
        carry0 = (hf_sc[...], cf_sc[...], hb_sc[...], cb_sc[...])
        unroll = Tc if Tc <= 8 else 8
        h_f, c_f, h_b, c_b = lax.fori_loop(0, Tc, step, carry0, unroll=unroll)
        hf_sc[...] = h_f
        cf_sc[...] = c_f
        hb_sc[...] = h_b
        cb_sc[...] = c_b

    return kernel


# --------------------------------------------------------------------------- #
# Wrapper / tiling
# --------------------------------------------------------------------------- #
def _vmem_budget_bytes():
    """Scale the VMEM request from the actual chip (128 MiB v5e/v6e, 64 MiB/TC v7x)."""
    try:
        cap = int(pltpu.get_tpu_info().vmem_capacity_bytes)
    except Exception:
        cap = 64 * 1024 * 1024
    return int(min(0.75 * cap, 100 * 1024 * 1024))


def _pick_time_chunk(T, B, d_in, H, budget_bytes, max_chunk=None):
    """Largest chunk (in timesteps) that fits the per-chunk VMEM budget."""
    # Chunk-resident bytes per timestep: double-buffered bf16 x (fwd+bwd),
    # double-buffered bf16 y (fwd+bwd), and the two f32 gate-projection scratches.
    per_step = B * (8 * d_in + 8 * H + 32 * H)
    limit = max(1, budget_bytes // max(per_step, 1))
    if max_chunk is not None:
        limit = min(limit, max_chunk)
    if T <= limit:
        return T
    best = 1
    for tc in range(1, min(T, limit) + 1):
        if T % tc == 0:
            best = tc
    # NOTE: an awkward (e.g. prime) T that does not fit VMEM in one chunk degenerates
    # to small chunks; a padded / remainder tail chunk would lift that if ever needed.
    return best


def _lstm_bidir_layer(x_parts, wih_parts, whh, b, T, B, max_chunk=None):
    """One bidirectional LSTM layer; both directions fused in a single pallas_call.

    x_parts: tuple of (T*B, Dp) bf16 arrays whose feature dims concatenate to the
             layer input (1 part for the first layer, (y_fwd, y_bwd) afterwards).
    Returns (y_fwd, y_bwd), each (T, B, H) bf16, aligned to the original time axis.
    """
    H = int(whh.shape[1])
    n_parts = len(x_parts)
    part_dims = tuple(int(p.shape[-1]) for p in x_parts)
    d_in = sum(part_dims)

    budget = _vmem_budget_bytes()
    w_bytes = 2 * 2 * (d_in + H) * 4 * H * 2          # double-buffered bf16 weights
    chunk_budget = max(int(0.8 * budget) - w_bytes, budget // 8)
    Tc = _pick_time_chunk(T, B, d_in, H, chunk_budget, max_chunk)
    n_tc = T // Tc
    nrev = n_tc - 1

    in_specs = []
    call_args = []
    for xp, Dp in zip(x_parts, part_dims):
        in_specs.append(pl.BlockSpec((Tc * B, Dp), lambda t: (t, 0)))         # fwd chunk
        in_specs.append(pl.BlockSpec((Tc * B, Dp), lambda t: (nrev - t, 0)))  # bwd chunk
        call_args += [xp, xp]
    for wp, Dp in zip(wih_parts, part_dims):
        in_specs.append(pl.BlockSpec((2, Dp, 4 * H), lambda t: (0, 0, 0)))
        call_args.append(wp)
    in_specs.append(pl.BlockSpec((2, H, 4 * H), lambda t: (0, 0, 0)))
    in_specs.append(pl.BlockSpec((2, 1, 4 * H), lambda t: (0, 0, 0)))
    call_args += [whh, b]

    out_specs = [
        pl.BlockSpec((Tc, B, H), lambda t: (t, 0, 0)),          # forward outputs
        pl.BlockSpec((Tc, B, H), lambda t: (nrev - t, 0, 0)),   # backward outputs
    ]
    out_shape = [jax.ShapeDtypeStruct((T, B, H), jnp.bfloat16),
                 jax.ShapeDtypeStruct((T, B, H), jnp.bfloat16)]

    grid_spec = pltpu.PrefetchScalarGridSpec(
        num_scalar_prefetch=0,
        grid=(n_tc,),
        in_specs=in_specs,
        out_specs=out_specs,
        scratch_shapes=[
            pltpu.VMEM((B, H), jnp.float32),            # h forward
            pltpu.VMEM((B, H), jnp.float32),            # c forward
            pltpu.VMEM((B, H), jnp.float32),            # h backward
            pltpu.VMEM((B, H), jnp.float32),            # c backward
            pltpu.VMEM((Tc, B, 4 * H), jnp.float32),    # hoisted gates, forward
            pltpu.VMEM((Tc, B, 4 * H), jnp.float32),    # hoisted gates, backward
        ],
    )

    cost = pl.CostEstimate(
        flops=int(2 * T * B * (2 * d_in * 4 * H + 2 * H * 4 * H)),
        transcendentals=int(2 * T * B * 5 * H),
        bytes_accessed=int(2 * T * B * d_in * 2 + 2 * T * B * H * 2
                           + (2 * d_in * 4 * H + 2 * H * 4 * H) * 2 + 2 * 4 * H * 4),
    )

    yf, yb = pl.pallas_call(
        _make_bidir_kernel(n_parts, Tc, B, H),
        out_shape=out_shape,
        grid_spec=grid_spec,
        compiler_params=pltpu.CompilerParams(
            dimension_semantics=("arbitrary",),
            vmem_limit_bytes=int(budget),
        ),
        cost_estimate=cost,
    )(*call_args)
    return yf, yb


def brnn_forward(x, params, max_chunk_timesteps=None):
    """x: (batch, seq, features) -> (batch, seq, 2*hidden).  dropout_rate = 0."""
    B, T, _ = x.shape
    H = int(params[0]["whh"].shape[1])
    B_p = ((B + 7) // 8) * 8                                  # pad batch to sublane multiple

    xt = jnp.transpose(x, (1, 0, 2)).astype(jnp.bfloat16)     # time-major, bf16 once up front
    if B_p != B:
        xt = jnp.pad(xt, ((0, 0), (0, B_p - B), (0, 0)))
    D = xt.shape[-1]
    parts = (xt.reshape(T * B_p, D),)                         # flat (time*batch, feat)

    for lp in params:
        yf, yb = _lstm_bidir_layer(parts, lp["wih_parts"], lp["whh"], lp["b"],
                                   T, B_p, max_chunk=max_chunk_timesteps)
        # Feed the two direction outputs to the next layer as separate parts with
        # split input weights -> no per-layer concatenate pass over HBM.
        parts = (yf.reshape(T * B_p, H), yb.reshape(T * B_p, H))

    yf = parts[0].reshape(T, B_p, H)[:, :B]
    yb = parts[1].reshape(T, B_p, H)[:, :B]
    out = jnp.concatenate([yf, yb], axis=-1)                  # single concat, final output only
    return jnp.transpose(out, (1, 0, 2)).astype(jnp.float32)  # (batch, seq, 2H)


# --------------------------------------------------------------------------- #
# Parameters (mirror nn.LSTM(bidirectional=True) init)
# --------------------------------------------------------------------------- #
def init_brnn_params(key, input_size, hidden_size, num_layers):
    params = []
    H = hidden_size
    scale = 1.0 / jnp.sqrt(hidden_size)
    for layer in range(num_layers):
        d_in = input_size if layer == 0 else 2 * hidden_size
        wih_dirs, whh_dirs, b_dirs = [], [], []
        for _ in range(2):
            key, k1, k2, k3, k4 = jax.random.split(key, 5)
            w_ih = jax.random.uniform(k1, (4 * H, d_in), minval=-scale, maxval=scale,
                                      dtype=jnp.float32)
            w_hh = jax.random.uniform(k2, (4 * H, H), minval=-scale, maxval=scale,
                                      dtype=jnp.float32)
            b_ih = jax.random.uniform(k3, (4 * H,), minval=-scale, maxval=scale,
                                      dtype=jnp.float32)
            b_hh = jax.random.uniform(k4, (4 * H,), minval=-scale, maxval=scale,
                                      dtype=jnp.float32)
            wih_dirs.append(w_ih.T)                      # (d_in, 4H)
            whh_dirs.append(w_hh.T)                      # (H, 4H)
            b_dirs.append((b_ih + b_hh).reshape(1, -1))  # (1, 4H)
        wih = jnp.stack(wih_dirs).astype(jnp.bfloat16)   # (2, d_in, 4H)
        if layer == 0:
            wih_parts = (wih,)
        else:
            # Split along input features so the next layer consumes (y_fwd, y_bwd)
            # directly (feature order [fwd | bwd] matches nn.LSTM bidirectional).
            wih_parts = (wih[:, :H, :], wih[:, H:, :])
        params.append({
            "wih_parts": wih_parts,                           # tuple of (2, Dp, 4H) bf16
            "whh": jnp.stack(whh_dirs).astype(jnp.bfloat16),  # (2, H, 4H) bf16
            "b": jnp.stack(b_dirs),                           # (2, 1, 4H) f32
        })
    return params


# --------------------------------------------------------------------------- #
# Pure-JAX reference (correctness check only)
# --------------------------------------------------------------------------- #
def _lstm_dir_ref(x_tbd, wih_t, whh_t, b):
    H = whh_t.shape[0]
    B = x_tbd.shape[1]

    def step(carry, x_t):
        h, c = carry
        gates = x_t @ wih_t + h @ whh_t + b
        i = jax.nn.sigmoid(gates[:, 0 * H:1 * H])
        f = jax.nn.sigmoid(gates[:, 1 * H:2 * H])
        g = jnp.tanh(gates[:, 2 * H:3 * H])
        o = jax.nn.sigmoid(gates[:, 3 * H:4 * H])
        c = f * c + i * g
        h = o * jnp.tanh(c)
        return (h, c), h

    init = (jnp.zeros((B, H), jnp.float32), jnp.zeros((B, H), jnp.float32))
    _, ys = lax.scan(step, init, x_tbd)
    return ys


def brnn_forward_ref(x, params):
    h = x.astype(jnp.float32)
    for lp in params:
        wih_full = jnp.concatenate([p.astype(jnp.float32) for p in lp["wih_parts"]],
                                   axis=1)                     # (2, d_in, 4H)
        whh = lp["whh"].astype(jnp.float32)
        dir_outs = []
        for d in range(2):
            xin = jnp.flip(h, axis=1) if d == 1 else h
            x_tbd = jnp.transpose(xin, (1, 0, 2))
            y = _lstm_dir_ref(x_tbd, wih_full[d], whh[d], lp["b"][d])
            y = jnp.transpose(y, (1, 0, 2))
            if d == 1:
                y = jnp.flip(y, axis=1)
            dir_outs.append(y)
        h = jnp.concatenate(dir_outs, axis=-1)
    return h


if __name__ == "__main__":
    batch, seq, input_size, hidden_size, num_layers = 2, 8, 16, 32, 2

    key = jax.random.PRNGKey(0)
    key, kx = jax.random.split(key)
    x = jax.random.normal(kx, (batch, seq, input_size), dtype=jnp.float32)
    params = init_brnn_params(key, input_size, hidden_size, num_layers)

    ref = jax.block_until_ready(brnn_forward_ref(x, params))

    # Single-chunk path (whole sequence resident per grid step).
    out = jax.block_until_ready(brnn_forward(x, params))
    assert out.shape == (batch, seq, 2 * hidden_size), out.shape
    # bf16 inputs / W_hh / inter-layer activations vs pure-f32 reference -> loosened tol.
    err = float(jnp.max(jnp.abs(out - ref)))
    assert jnp.allclose(out, ref, atol=4e-2, rtol=4e-2), f"mismatch, max abs diff {err}"

    # Multi-chunk path (grid > 1: forward walks chunks 0..n-1, backward n-1..0).
    out_c = jax.block_until_ready(brnn_forward(x, params, max_chunk_timesteps=4))
    err_c = float(jnp.max(jnp.abs(out_c - ref)))
    assert jnp.allclose(out_c, ref, atol=4e-2, rtol=4e-2), \
        f"chunked mismatch, max abs diff {err_c}"

    print("KERNEL_OK")
</pallas_src>

<mosaic_0001>
module attributes {stable_mosaic.version = 11 : i64} {
  func.func @kernel(%arg0: i32, %arg1: memref<64x16xbf16, #tpu.memory_space<vmem>>, %arg2: memref<64x16xbf16, #tpu.memory_space<vmem>>, %arg3: memref<2x16x128xbf16, #tpu.memory_space<vmem>>, %arg4: memref<2x32x128xbf16, #tpu.memory_space<vmem>>, %arg5: memref<2x1x128xf32, #tpu.memory_space<vmem>>, %arg6: memref<8x8x32xbf16, #tpu.memory_space<vmem>>, %arg7: memref<8x8x32xbf16, #tpu.memory_space<vmem>>, %arg8: memref<8x32xf32, #tpu.memory_space<vmem>>, %arg9: memref<8x32xf32, #tpu.memory_space<vmem>>, %arg10: memref<8x32xf32, #tpu.memory_space<vmem>>, %arg11: memref<8x32xf32, #tpu.memory_space<vmem>>, %arg12: memref<8x8x128xf32, #tpu.memory_space<vmem>>, %arg13: memref<8x8x128xf32, #tpu.memory_space<vmem>>) attributes {dimension_semantics = [#tpu.dimension_semantics<arbitrary>], iteration_bounds = array<i64: 1>, scalar_prefetch = 0 : i64, scratch_operands = 6 : i64, tpu.core_type = #tpu.core_type<tc>, window_params = [{transform_indices = @transform_0, window_bounds = array<i64: 64, 16>}, {transform_indices = @transform_1, window_bounds = array<i64: 64, 16>}, {pipeline_mode = #tpu.pipeline_mode<synchronous>, transform_indices = @transform_2, window_bounds = array<i64: 2, 16, 128>}, {pipeline_mode = #tpu.pipeline_mode<synchronous>, transform_indices = @transform_3, window_bounds = array<i64: 2, 32, 128>}, {pipeline_mode = #tpu.pipeline_mode<synchronous>, transform_indices = @transform_4, window_bounds = array<i64: 2, 1, 128>}, {transform_indices = @transform_5, window_bounds = array<i64: 8, 8, 32>}, {transform_indices = @transform_6, window_bounds = array<i64: 8, 8, 32>}]} {
    %c0_i32 = arith.constant 0 : i32
    %0 = arith.cmpi eq, %arg0, %c0_i32 : i32
    %1 = arith.extui %0 : i1 to i32
    %c0_i32_0 = arith.constant 0 : i32
    %2 = arith.cmpi ne, %1, %c0_i32_0 : i32
    scf.if %2 {
      %cst_165 = arith.constant 0.000000e+00 : f32
      %555 = vector.broadcast %cst_165 : f32 to vector<8x32xf32>
      %c0_166 = arith.constant 0 : index
      %c0_167 = arith.constant 0 : index
      %556 = vector.load %arg8[%c0_166, %c0_167] : memref<8x32xf32, #tpu.memory_space<vmem>>, vector<8x32xf32>
      tpu.vector_store %arg8[%c0_166, %c0_167], %555 {strides = array<i32>} : memref<8x32xf32, #tpu.memory_space<vmem>>, vector<8x32xf32>,
      %cst_168 = arith.constant 0.000000e+00 : f32
      %557 = vector.broadcast %cst_168 : f32 to vector<8x32xf32>
      %c0_169 = arith.constant 0 : index
      %c0_170 = arith.constant 0 : index
      %558 = vector.load %arg9[%c0_169, %c0_170] : memref<8x32xf32, #tpu.memory_space<vmem>>, vector<8x32xf32>
      tpu.vector_store %arg9[%c0_169, %c0_170], %557 {strides = array<i32>} : memref<8x32xf32, #tpu.memory_space<vmem>>, vector<8x32xf32>,
      %cst_171 = arith.constant 0.000000e+00 : f32
      %559 = vector.broadcast %cst_171 : f32 to vector<8x32xf32>
      %c0_172 = arith.constant 0 : index
      %c0_173 = arith.constant 0 : index
      %560 = vector.load %arg10[%c0_172, %c0_173] : memref<8x32xf32, #tpu.memory_space<vmem>>, vector<8x32xf32>
      tpu.vector_store %arg10[%c0_172, %c0_173], %559 {strides = array<i32>} : memref<8x32xf32, #tpu.memory_space<vmem>>, vector<8x32xf32>,
      %cst_174 = arith.constant 0.000000e+00 : f32
      %561 = vector.broadcast %cst_174 : f32 to vector<8x32xf32>
      %c0_175 = arith.constant 0 : index
      %c0_176 = arith.constant 0 : index
      %562 = vector.load %arg11[%c0_175, %c0_176] : memref<8x32xf32, #tpu.memory_space<vmem>>, vector<8x32xf32>
      tpu.vector_store %arg11[%c0_175, %c0_176], %561 {strides = array<i32>} : memref<8x32xf32, #tpu.memory_space<vmem>>, vector<8x32xf32>,
    } else {
    }
    %c0 = arith.constant 0 : index
    %c0_1 = arith.constant 0 : index
    %c0_2 = arith.constant 0 : index
    %3 = vector.load %arg5[%c0, %c0_1, %c0_2] : memref<2x1x128xf32, #tpu.memory_space<vmem>>, vector<1x1x128xf32>
    %4 = vector.shape_cast %3 : vector<1x1x128xf32> to vector<1x128xf32>
    %c1 = arith.constant 1 : index
    %c0_3 = arith.constant 0 : index
    %c0_4 = arith.constant 0 : index
    %5 = vector.load %arg5[%c1, %c0_3, %c0_4] : memref<2x1x128xf32, #tpu.memory_space<vmem>>, vector<1x1x128xf32>
    %6 = vector.shape_cast %5 : vector<1x1x128xf32> to vector<1x128xf32>
    %c0_5 = arith.constant 0 : index
    %c0_6 = arith.constant 0 : index
    %7 = vector.load %arg1[%c0_5, %c0_6] : memref<64x16xbf16, #tpu.memory_space<vmem>>, vector<64x16xbf16>
    %c0_7 = arith.constant 0 : index
    %c0_8 = arith.constant 0 : index
    %c0_9 = arith.constant 0 : index
    %8 = vector.load %arg3[%c0_7, %c0_8, %c0_9] : memref<2x16x128xbf16, #tpu.memory_space<vmem>>, vector<1x16x128xbf16>
    %9 = vector.shape_cast %8 : vector<1x16x128xbf16> to vector<16x128xbf16>
    %cst = arith.constant dense<0.000000e+00> : vector<64x128xf32>
    %10 = tpu.matmul %7, %9, %cst {dimension_numbers = #tpu.dot_dimension_numbers<[1], [0], [0], [1], [0, 0, 1, 1], [], []>} : vector<64x16xbf16>, vector<16x128xbf16>, vector<64x128xf32> -> vector<64x128xf32>
    %11 = vector.broadcast %4 : vector<1x128xf32> to vector<64x128xf32>
    %12 = arith.addf %11, %10 : vector<64x128xf32>
    %c0_10 = arith.constant 0 : index
    %c0_11 = arith.constant 0 : index
    %13 = vector.load %arg2[%c0_10, %c0_11] : memref<64x16xbf16, #tpu.memory_space<vmem>>, vector<64x16xbf16>
    %c1_12 = arith.constant 1 : index
    %c0_13 = arith.constant 0 : index
    %c0_14 = arith.constant 0 : index
    %14 = vector.load %arg3[%c1_12, %c0_13, %c0_14] : memref<2x16x128xbf16, #tpu.memory_space<vmem>>, vector<1x16x128xbf16>
    %15 = vector.shape_cast %14 : vector<1x16x128xbf16> to vector<16x128xbf16>
    %cst_15 = arith.constant dense<0.000000e+00> : vector<64x128xf32>
    %16 = tpu.matmul %13, %15, %cst_15 {dimension_numbers = #tpu.dot_dimension_numbers<[1], [0], [0], [1], [0, 0, 1, 1], [], []>} : vector<64x16xbf16>, vector<16x128xbf16>, vector<64x128xf32> -> vector<64x128xf32>
    %17 = vector.broadcast %6 : vector<1x128xf32> to vector<64x128xf32>
    %18 = arith.addf %17, %16 : vector<64x128xf32>
    %19 = vector.shape_cast %12 : vector<64x128xf32> to vector<8x8x128xf32>
    %c0_16 = arith.constant 0 : index
    %c0_17 = arith.constant 0 : index
    %c0_18 = arith.constant 0 : index
    %20 = vector.load %arg12[%c0_16, %c0_17, %c0_18] : memref<8x8x128xf32, #tpu.memory_space<vmem>>, vector<8x8x128xf32>
    tpu.vector_store %arg12[%c0_16, %c0_17, %c0_18], %19 {strides = array<i32>} : memref<8x8x128xf32, #tpu.memory_space<vmem>>, vector<8x8x128xf32>,
    %21 = vector.shape_cast %18 : vector<64x128xf32> to vector<8x8x128xf32>
    %c0_19 = arith.constant 0 : index
    %c0_20 = arith.constant 0 : index
    %c0_21 = arith.constant 0 : index
    %22 = vector.load %arg13[%c0_19, %c0_20, %c0_21] : memref<8x8x128xf32, #tpu.memory_space<vmem>>, vector<8x8x128xf32>
    tpu.vector_store %arg13[%c0_19, %c0_20, %c0_21], %21 {strides = array<i32>} : memref<8x8x128xf32, #tpu.memory_space<vmem>>, vector<8x8x128xf32>,
    %c0_22 = arith.constant 0 : index
    %c0_23 = arith.constant 0 : index
    %c0_24 = arith.constant 0 : index
    %23 = vector.load %arg4[%c0_22, %c0_23, %c0_24] : memref<2x32x128xbf16, #tpu.memory_space<vmem>>, vector<1x32x128xbf16>
    %24 = vector.shape_cast %23 : vector<1x32x128xbf16> to vector<32x128xbf16>
    %c1_25 = arith.constant 1 : index
    %c0_26 = arith.constant 0 : index
    %c0_27 = arith.constant 0 : index
    %25 = vector.load %arg4[%c1_25, %c0_26, %c0_27] : memref<2x32x128xbf16, #tpu.memory_space<vmem>>, vector<1x32x128xbf16>
    %26 = vector.shape_cast %25 : vector<1x32x128xbf16> to vector<32x128xbf16>
    %c0_28 = arith.constant 0 : index
    %c0_29 = arith.constant 0 : index
    %27 = vector.load %arg8[%c0_28, %c0_29] : memref<8x32xf32, #tpu.memory_space<vmem>>, vector<8x32xf32>
    %c0_30 = arith.constant 0 : index
    %c0_31 = arith.constant 0 : index
    %28 = vector.load %arg9[%c0_30, %c0_31] : memref<8x32xf32, #tpu.memory_space<vmem>>, vector<8x32xf32>
    %c0_32 = arith.constant 0 : index
    %c0_33 = arith.constant 0 : index
    %29 = vector.load %arg10[%c0_32, %c0_33] : memref<8x32xf32, #tpu.memory_space<vmem>>, vector<8x32xf32>
    %c0_34 = arith.constant 0 : index
    %c0_35 = arith.constant 0 : index
    %30 = vector.load %arg11[%c0_34, %c0_35] : memref<8x32xf32, #tpu.memory_space<vmem>>, vector<8x32xf32>
    %c0_i32_36 = arith.constant 0 : i32
    %c7_i32 = arith.constant 7 : i32
    %31 = arith.subi %c7_i32, %c0_i32_36 : i32
    %32 = arith.index_cast %c0_i32_36 : i32 to index
    %c0_37 = arith.constant 0 : index
    %c0_38 = arith.constant 0 : index
    %33 = vector.load %arg12[%32, %c0_37, %c0_38] : memref<8x8x128xf32, #tpu.memory_space<vmem>>, vector<1x8x128xf32>
    %34 = vector.shape_cast %33 : vector<1x8x128xf32> to vector<8x128xf32>
    %35 = arith.truncf %27 : vector<8x32xf32> to vector<8x32xbf16>
    %cst_39 = arith.constant dense<0.000000e+00> : vector<8x128xf32>
    %36 = tpu.matmul %35, %24, %cst_39 {dimension_numbers = #tpu.dot_dimension_numbers<[1], [0], [0], [1], [0, 0, 1, 1], [], []>} : vector<8x32xbf16>, vector<32x128xbf16>, vector<8x128xf32> -> vector<8x128xf32>
    %37 = arith.addf %34, %36 : vector<8x128xf32>
    %38 = arith.index_cast %31 : i32 to index
    %c0_40 = arith.constant 0 : index
    %c0_41 = arith.constant 0 : index
    %39 = vector.load %arg13[%38, %c0_40, %c0_41] : memref<8x8x128xf32, #tpu.memory_space<vmem>>, vector<1x8x128xf32>
    %40 = vector.shape_cast %39 : vector<1x8x128xf32> to vector<8x128xf32>
    %41 = arith.truncf %29 : vector<8x32xf32> to vector<8x32xbf16>
    %cst_42 = arith.constant dense<0.000000e+00> : vector<8x128xf32>
    %42 = tpu.matmul %41, %26, %cst_42 {dimension_numbers = #tpu.dot_dimension_numbers<[1], [0], [0], [1], [0, 0, 1, 1], [], []>} : vector<8x32xbf16>, vector<32x128xbf16>, vector<8x128xf32> -> vector<8x128xf32>
    %43 = arith.addf %40, %42 : vector<8x128xf32>
    %44 = vector.extract_strided_slice %37 {offsets = [0, 0], sizes = [8, 64], strides = [1, 1]} : vector<8x128xf32> to vector<8x64xf32>
    %45 = arith.negf %44 : vector<8x64xf32>
    %46 = math.exp %45 : vector<8x64xf32>
    %cst_43 = arith.constant 1.000000e+00 : f32
    %47 = vector.broadcast %cst_43 : f32 to vector<8x64xf32>
    %48 = arith.addf %47, %46 : vector<8x64xf32>
    %49 = arith.divf %47, %48 : vector<8x64xf32>
    %50 = vector.extract_strided_slice %37 {offsets = [0, 96], sizes = [8, 32], strides = [1, 1]} : vector<8x128xf32> to vector<8x32xf32>
    %51 = arith.negf %50 : vector<8x32xf32>
    %52 = math.exp %51 : vector<8x32xf32>
    %cst_44 = arith.constant 1.000000e+00 : f32
    %53 = vector.broadcast %cst_44 : f32 to vector<8x32xf32>
    %54 = arith.addf %53, %52 : vector<8x32xf32>
    %55 = arith.divf %53, %54 : vector<8x32xf32>
    %56 = vector.extract_strided_slice %37 {offsets = [0, 64], sizes = [8, 32], strides = [1, 1]} : vector<8x128xf32> to vector<8x32xf32>
    %57 = math.tanh %56 : vector<8x32xf32>
    %58 = vector.extract_strided_slice %49 {offsets = [0, 32], sizes = [8, 32], strides = [1, 1]} : vector<8x64xf32> to vector<8x32xf32>
    %59 = arith.mulf %58, %28 : vector<8x32xf32>
    %60 = vector.extract_strided_slice %49 {offsets = [0, 0], sizes = [8, 32], strides = [1, 1]} : vector<8x64xf32> to vector<8x32xf32>
    %61 = arith.mulf %60, %57 : vector<8x32xf32>
    %62 = arith.addf %59, %61 : vector<8x32xf32>
    %63 = math.tanh %62 : vector<8x32xf32>
    %64 = arith.mulf %55, %63 : vector<8x32xf32>
    %65 = vector.extract_strided_slice %43 {offsets = [0, 0], sizes = [8, 64], strides = [1, 1]} : vector<8x128xf32> to vector<8x64xf32>
    %66 = arith.negf %65 : vector<8x64xf32>
    %67 = math.exp %66 : vector<8x64xf32>
    %cst_45 = arith.constant 1.000000e+00 : f32
    %68 = vector.broadcast %cst_45 : f32 to vector<8x64xf32>
    %69 = arith.addf %68, %67 : vector<8x64xf32>
    %70 = arith.divf %68, %69 : vector<8x64xf32>
    %71 = vector.extract_strided_slice %43 {offsets = [0, 96], sizes = [8, 32], strides = [1, 1]} : vector<8x128xf32> to vector<8x32xf32>
    %72 = arith.negf %71 : vector<8x32xf32>
    %73 = math.exp %72 : vector<8x32xf32>
    %cst_46 = arith.constant 1.000000e+00 : f32
    %74 = vector.broadcast %cst_46 : f32 to vector<8x32xf32>
    %75 = arith.addf %74, %73 : vector<8x32xf32>
    %76 = arith.divf %74, %75 : vector<8x32xf32>
    %77 = vector.extract_strided_slice %43 {offsets = [0, 64], sizes = [8, 32], strides = [1, 1]} : vector<8x128xf32> to vector<8x32xf32>
    %78 = math.tanh %77 : vector<8x32xf32>
    %79 = vector.extract_strided_slice %70 {offsets = [0, 32], sizes = [8, 32], strides = [1, 1]} : vector<8x64xf32> to vector<8x32xf32>
    %80 = arith.mulf %79, %30 : vector<8x32xf32>
    %81 = vector.extract_strided_slice %70 {offsets = [0, 0], sizes = [8, 32], strides = [1, 1]} : vector<8x64xf32> to vector<8x32xf32>
    %82 = arith.mulf %81, %78 : vector<8x32xf32>
    %83 = arith.addf %80, %82 : vector<8x32xf32>
    %84 = math.tanh %83 : vector<8x32xf32>
    %85 = arith.mulf %76, %84 : vector<8x32xf32>
    %86 = arith.truncf %64 : vector<8x32xf32> to vector<8x32xbf16>
    %87 = arith.index_cast %c0_i32_36 : i32 to index
    %c0_47 = arith.constant 0 : index
    %c0_48 = arith.constant 0 : index
    %88 = vector.load %arg6[%87, %c0_47, %c0_48] : memref<8x8x32xbf16, #tpu.memory_space<vmem>>, vector<1x8x32xbf16>
    %89 = vector.shape_cast %88 : vector<1x8x32xbf16> to vector<8x32xbf16>
    %90 = vector.shape_cast %86 : vector<8x32xbf16> to vector<1x8x32xbf16>
    tpu.vector_store %arg6[%87, %c0_47, %c0_48], %90 {strides = array<i32>} : memref<8x8x32xbf16, #tpu.memory_space<vmem>>, vector<1x8x32xbf16>,
    %91 = arith.truncf %85 : vector<8x32xf32> to vector<8x32xbf16>
    %92 = arith.index_cast %31 : i32 to index
    %c0_49 = arith.constant 0 : index
    %c0_50 = arith.constant 0 : index
    %93 = vector.load %arg7[%92, %c0_49, %c0_50] : memref<8x8x32xbf16, #tpu.memory_space<vmem>>, vector<1x8x32xbf16>
    %94 = vector.shape_cast %93 : vector<1x8x32xbf16> to vector<8x32xbf16>
    %95 = vector.shape_cast %91 : vector<8x32xbf16> to vector<1x8x32xbf16>
    tpu.vector_store %arg7[%92, %c0_49, %c0_50], %95 {strides = array<i32>} : memref<8x8x32xbf16, #tpu.memory_space<vmem>>, vector<1x8x32xbf16>,
    %c1_i32 = arith.constant 1 : i32
    %c7_i32_51 = arith.constant 7 : i32
    %96 = arith.subi %c7_i32_51, %c1_i32 : i32
    %97 = arith.index_cast %c1_i32 : i32 to index
    %c0_52 = arith.constant 0 : index
    %c0_53 = arith.constant 0 : index
    %98 = vector.load %arg12[%97, %c0_52, %c0_53] : memref<8x8x128xf32, #tpu.memory_space<vmem>>, vector<1x8x128xf32>
    %99 = vector.shape_cast %98 : vector<1x8x128xf32> to vector<8x128xf32>
    %100 = arith.truncf %64 : vector<8x32xf32> to vector<8x32xbf16>
    %cst_54 = arith.constant dense<0.000000e+00> : vector<8x128xf32>
    %101 = tpu.matmul %100, %24, %cst_54 {dimension_numbers = #tpu.dot_dimension_numbers<[1], [0], [0], [1], [0, 0, 1, 1], [], []>} : vector<8x32xbf16>, vector<32x128xbf16>, vector<8x128xf32> -> vector<8x128xf32>
    %102 = arith.addf %99, %101 : vector<8x128xf32>
    %103 = arith.index_cast %96 : i32 to index
    %c0_55 = arith.constant 0 : index
    %c0_56 = arith.constant 0 : index
    %104 = vector.load %arg13[%103, %c0_55, %c0_56] : memref<8x8x128xf32, #tpu.memory_space<vmem>>, vector<1x8x128xf32>
    %105 = vector.shape_cast %104 : vector<1x8x128xf32> to vector<8x128xf32>
    %106 = arith.truncf %85 : vector<8x32xf32> to vector<8x32xbf16>
    %cst_57 = arith.constant dense<0.000000e+00> : vector<8x128xf32>
    %107 = tpu.matmul %106, %26, %cst_57 {dimension_numbers = #tpu.dot_dimension_numbers<[1], [0], [0], [1], [0, 0, 1, 1], [], []>} : vector<8x32xbf16>, vector<32x128xbf16>, vector<8x128xf32> -> vector<8x128xf32>
    %108 = arith.addf %105, %107 : vector<8x128xf32>
    %109 = vector.extract_strided_slice %102 {offsets = [0, 0], sizes = [8, 64], strides = [1, 1]} : vector<8x128xf32> to vector<8x64xf32>
    %110 = arith.negf %109 : vector<8x64xf32>
    %111 = math.exp %110 : vector<8x64xf32>
    %cst_58 = arith.constant 1.000000e+00 : f32
    %112 = vector.broadcast %cst_58 : f32 to vector<8x64xf32>
    %113 = arith.addf %112, %111 : vector<8x64xf32>
    %114 = arith.divf %112, %113 : vector<8x64xf32>
    %115 = vector.extract_strided_slice %102 {offsets = [0, 96], sizes = [8, 32], strides = [1, 1]} : vector<8x128xf32> to vector<8x32xf32>
    %116 = arith.negf %115 : vector<8x32xf32>
    %117 = math.exp %116 : vector<8x32xf32>
    %cst_59 = arith.constant 1.000000e+00 : f32
    %118 = vector.broadcast %cst_59 : f32 to vector<8x32xf32>
    %119 = arith.addf %118, %117 : vector<8x32xf32>
    %120 = arith.divf %118, %119 : vector<8x32xf32>
    %121 = vector.extract_strided_slice %102 {offsets = [0, 64], sizes = [8, 32], strides = [1, 1]} : vector<8x128xf32> to vector<8x32xf32>
    %122 = math.tanh %121 : vector<8x32xf32>
    %123 = vector.extract_strided_slice %114 {offsets = [0, 32], sizes = [8, 32], strides = [1, 1]} : vector<8x64xf32> to vector<8x32xf32>
    %124 = arith.mulf %123, %62 : vector<8x32xf32>
    %125 = vector.extract_strided_slice %114 {offsets = [0, 0], sizes = [8, 32], strides = [1, 1]} : vector<8x64xf32> to vector<8x32xf32>
    %126 = arith.mulf %125, %122 : vector<8x32xf32>
    %127 = arith.addf %124, %126 : vector<8x32xf32>
    %128 = math.tanh %127 : vector<8x32xf32>
    %129 = arith.mulf %120, %128 : vector<8x32xf32>
    %130 = vector.extract_strided_slice %108 {offsets = [0, 0], sizes = [8, 64], strides = [1, 1]} : vector<8x128xf32> to vector<8x64xf32>
    %131 = arith.negf %130 : vector<8x64xf32>
    %132 = math.exp %131 : vector<8x64xf32>
    %cst_60 = arith.constant 1.000000e+00 : f32
    %133 = vector.broadcast %cst_60 : f32 to vector<8x64xf32>
    %134 = arith.addf %133, %132 : vector<8x64xf32>
    %135 = arith.divf %133, %134 : vector<8x64xf32>
    %136 = vector.extract_strided_slice %108 {offsets = [0, 96], sizes = [8, 32], strides = [1, 1]} : vector<8x128xf32> to vector<8x32xf32>
    %137 = arith.negf %136 : vector<8x32xf32>
    %138 = math.exp %137 : vector<8x32xf32>
    %cst_61 = arith.constant 1.000000e+00 : f32
    %139 = vector.broadcast %cst_61 : f32 to vector<8x32xf32>
    %140 = arith.addf %139, %138 : vector<8x32xf32>
    %141 = arith.divf %139, %140 : vector<8x32xf32>
    %142 = vector.extract_strided_slice %108 {offsets = [0, 64], sizes = [8, 32], strides = [1, 1]} : vector<8x128xf32> to vector<8x32xf32>
    %143 = math.tanh %142 : vector<8x32xf32>
    %144 = vector.extract_strided_slice %135 {offsets = [0, 32], sizes = [8, 32], strides = [1, 1]} : vector<8x64xf32> to vector<8x32xf32>
    %145 = arith.mulf %144, %83 : vector<8x32xf32>
    %146 = vector.extract_strided_slice %135 {offsets = [0, 0], sizes = [8, 32], strides = [1, 1]} : vector<8x64xf32> to vector<8x32xf32>
    %147 = arith.mulf %146, %143 : vector<8x32xf32>
    %148 = arith.addf %145, %147 : vector<8x32xf32>
    %149 = math.tanh %148 : vector<8x32xf32>
    %150 = arith.mulf %141, %149 : vector<8x32xf32>
    %151 = arith.truncf %129 : vector<8x32xf32> to vector<8x32xbf16>
    %152 = arith.index_cast %c1_i32 : i32 to index
    %c0_62 = arith.constant 0 : index
    %c0_63 = arith.constant 0 : index
    %153 = vector.load %arg6[%152, %c0_62, %c0_63] : memref<8x8x32xbf16, #tpu.memory_space<vmem>>, vector<1x8x32xbf16>
    %154 = vector.shape_cast %153 : vector<1x8x32xbf16> to vector<8x32xbf16>
    %155 = vector.shape_cast %151 : vector<8x32xbf16> to vector<1x8x32xbf16>
    tpu.vector_store %arg6[%152, %c0_62, %c0_63], %155 {strides = array<i32>} : memref<8x8x32xbf16, #tpu.memory_space<vmem>>, vector<1x8x32xbf16>,
    %156 = arith.truncf %150 : vector<8x32xf32> to vector<8x32xbf16>
    %157 = arith.index_cast %96 : i32 to index
    %c0_64 = arith.constant 0 : index
    %c0_65 = arith.constant 0 : index
    %158 = vector.load %arg7[%157, %c0_64, %c0_65] : memref<8x8x32xbf16, #tpu.memory_space<vmem>>, vector<1x8x32xbf16>
    %159 = vector.shape_cast %158 : vector<1x8x32xbf16> to vector<8x32xbf16>
    %160 = vector.shape_cast %156 : vector<8x32xbf16> to vector<1x8x32xbf16>
    tpu.vector_store %arg7[%157, %c0_64, %c0_65], %160 {strides = array<i32>} : memref<8x8x32xbf16, #tpu.memory_space<vmem>>, vector<1x8x32xbf16>,
    %c2_i32 = arith.constant 2 : i32
    %c7_i32_66 = arith.constant 7 : i32
    %161 = arith.subi %c7_i32_66, %c2_i32 : i32
    %162 = arith.index_cast %c2_i32 : i32 to index
    %c0_67 = arith.constant 0 : index
    %c0_68 = arith.constant 0 : index
    %163 = vector.load %arg12[%162, %c0_67, %c0_68] : memref<8x8x128xf32, #tpu.memory_space<vmem>>, vector<1x8x128xf32>
    %164 = vector.shape_cast %163 : vector<1x8x128xf32> to vector<8x128xf32>
    %165 = arith.truncf %129 : vector<8x32xf32> to vector<8x32xbf16>
    %cst_69 = arith.constant dense<0.000000e+00> : vector<8x128xf32>
    %166 = tpu.matmul %165, %24, %cst_69 {dimension_numbers = #tpu.dot_dimension_numbers<[1], [0], [0], [1], [0, 0, 1, 1], [], []>} : vector<8x32xbf16>, vector<32x128xbf16>, vector<8x128xf32> -> vector<8x128xf32>
    %167 = arith.addf %164, %166 : vector<8x128xf32>
    %168 = arith.index_cast %161 : i32 to index
    %c0_70 = arith.constant 0 : index
    %c0_71 = arith.constant 0 : index
    %169 = vector.load %arg13[%168, %c0_70, %c0_71] : memref<8x8x128xf32, #tpu.memory_space<vmem>>, vector<1x8x128xf32>
    %170 = vector.shape_cast %169 : vector<1x8x128xf32> to vector<8x128xf32>
    %171 = arith.truncf %150 : vector<8x32xf32> to vector<8x32xbf16>
    %cst_72 = arith.constant dense<0.000000e+00> : vector<8x128xf32>
    %172 = tpu.matmul %171, %26, %cst_72 {dimension_numbers = #tpu.dot_dimension_numbers<[1], [0], [0], [1], [0, 0, 1, 1], [], []>} : vector<8x32xbf16>, vector<32x128xbf16>, vector<8x128xf32> -> vector<8x128xf32>
    %173 = arith.addf %170, %172 : vector<8x128xf32>
    %174 = vector.extract_strided_slice %167 {offsets = [0, 0], sizes = [8, 64], strides = [1, 1]} : vector<8x128xf32> to vector<8x64xf32>
    %175 = arith.negf %174 : vector<8x64xf32>
    %176 = math.exp %175 : vector<8x64xf32>
    %cst_73 = arith.constant 1.000000e+00 : f32
    %177 = vector.broadcast %cst_73 : f32 to vector<8x64xf32>
    %178 = arith.addf %177, %176 : vector<8x64xf32>
    %179 = arith.divf %177, %178 : vector<8x64xf32>
    %180 = vector.extract_strided_slice %167 {offsets = [0, 96], sizes = [8, 32], strides = [1, 1]} : vector<8x128xf32> to vector<8x32xf32>
    %181 = arith.negf %180 : vector<8x32xf32>
    %182 = math.exp %181 : vector<8x32xf32>
    %cst_74 = arith.constant 1.000000e+00 : f32
    %183 = vector.broadcast %cst_74 : f32 to vector<8x32xf32>
    %184 = arith.addf %183, %182 : vector<8x32xf32>
    %185 = arith.divf %183, %184 : vector<8x32xf32>
    %186 = vector.extract_strided_slice %167 {offsets = [0, 64], sizes = [8, 32], strides = [1, 1]} : vector<8x128xf32> to vector<8x32xf32>
    %187 = math.tanh %186 : vector<8x32xf32>
    %188 = vector.extract_strided_slice %179 {offsets = [0, 32], sizes = [8, 32], strides = [1, 1]} : vector<8x64xf32> to vector<8x32xf32>
    %189 = arith.mulf %188, %127 : vector<8x32xf32>
    %190 = vector.extract_strided_slice %179 {offsets = [0, 0], sizes = [8, 32], strides = [1, 1]} : vector<8x64xf32> to vector<8x32xf32>
    %191 = arith.mulf %190, %187 : vector<8x32xf32>
    %192 = arith.addf %189, %191 : vector<8x32xf32>
    %193 = math.tanh %192 : vector<8x32xf32>
    %194 = arith.mulf %185, %193 : vector<8x32xf32>
    %195 = vector.extract_strided_slice %173 {offsets = [0, 0], sizes = [8, 64], strides = [1, 1]} : vector<8x128xf32> to vector<8x64xf32>
    %196 = arith.negf %195 : vector<8x64xf32>
    %197 = math.exp %196 : vector<8x64xf32>
    %cst_75 = arith.constant 1.000000e+00 : f32
    %198 = vector.broadcast %cst_75 : f32 to vector<8x64xf32>
    %199 = arith.addf %198, %197 : vector<8x64xf32>
    %200 = arith.divf %198, %199 : vector<8x64xf32>
    %201 = vector.extract_strided_slice %173 {offsets = [0, 96], sizes = [8, 32], strides = [1, 1]} : vector<8x128xf32> to vector<8x32xf32>
    %202 = arith.negf %201 : vector<8x32xf32>
    %203 = math.exp %202 : vector<8x32xf32>
    %cst_76 = arith.constant 1.000000e+00 : f32
    %204 = vector.broadcast %cst_76 : f32 to vector<8x32xf32>
    %205 = arith.addf %204, %203 : vector<8x32xf32>
    %206 = arith.divf %204, %205 : vector<8x32xf32>
    %207 = vector.extract_strided_slice %173 {offsets = [0, 64], sizes = [8, 32], strides = [1, 1]} : vector<8x128xf32> to vector<8x32xf32>
    %208 = math.tanh %207 : vector<8x32xf32>
    %209 = vector.extract_strided_slice %200 {offsets = [0, 32], sizes = [8, 32], strides = [1, 1]} : vector<8x64xf32> to vector<8x32xf32>
    %210 = arith.mulf %209, %148 : vector<8x32xf32>
    %211 = vector.extract_strided_slice %200 {offsets = [0, 0], sizes = [8, 32], strides = [1, 1]} : vector<8x64xf32> to vector<8x32xf32>
    %212 = arith.mulf %211, %208 : vector<8x32xf32>
    %213 = arith.addf %210, %212 : vector<8x32xf32>
    %214 = math.tanh %213 : vector<8x32xf32>
    %215 = arith.mulf %206, %214 : vector<8x32xf32>
    %216 = arith.truncf %194 : vector<8x32xf32> to vector<8x32xbf16>
    %217 = arith.index_cast %c2_i32 : i32 to index
    %c0_77 = arith.constant 0 : index
    %c0_78 = arith.constant 0 : index
    %218 = vector.load %arg6[%217, %c0_77, %c0_78] : memref<8x8x32xbf16, #tpu.memory_space<vmem>>, vector<1x8x32xbf16>
    %219 = vector.shape_cast %218 : vector<1x8x32xbf16> to vector<8x32xbf16>
    %220 = vector.shape_cast %216 : vector<8x32xbf16> to vector<1x8x32xbf16>
    tpu.vector_store %arg6[%217, %c0_77, %c0_78], %220 {strides = array<i32>} : memref<8x8x32xbf16, #tpu.memory_space<vmem>>, vector<1x8x32xbf16>,
    %221 = arith.truncf %215 : vector<8x32xf32> to vector<8x32xbf16>
    %222 = arith.index_cast %161 : i32 to index
    %c0_79 = arith.constant 0 : index
    %c0_80 = arith.constant 0 : index
    %223 = vector.load %arg7[%222, %c0_79, %c0_80] : memref<8x8x32xbf16, #tpu.memory_space<vmem>>, vector<1x8x32xbf16>
    %224 = vector.shape_cast %223 : vector<1x8x32xbf16> to vector<8x32xbf16>
    %225 = vector.shape_cast %221 : vector<8x32xbf16> to vector<1x8x32xbf16>
    tpu.vector_store %arg7[%222, %c0_79, %c0_80], %225 {strides = array<i32>} : memref<8x8x32xbf16, #tpu.memory_space<vmem>>, vector<1x8x32xbf16>,
    %c3_i32 = arith.constant 3 : i32
    %c7_i32_81 = arith.constant 7 : i32
    %226 = arith.subi %c7_i32_81, %c3_i32 : i32
    %227 = arith.index_cast %c3_i32 : i32 to index
    %c0_82 = arith.constant 0 : index
    %c0_83 = arith.constant 0 : index
    %228 = vector.load %arg12[%227, %c0_82, %c0_83] : memref<8x8x128xf32, #tpu.memory_space<vmem>>, vector<1x8x128xf32>
    %229 = vector.shape_cast %228 : vector<1x8x128xf32> to vector<8x128xf32>
    %230 = arith.truncf %194 : vector<8x32xf32> to vector<8x32xbf16>
    %cst_84 = arith.constant dense<0.000000e+00> : vector<8x128xf32>
    %231 = tpu.matmul %230, %24, %cst_84 {dimension_numbers = #tpu.dot_dimension_numbers<[1], [0], [0], [1], [0, 0, 1, 1], [], []>} : vector<8x32xbf16>, vector<32x128xbf16>, vector<8x128xf32> -> vector<8x128xf32>
    %232 = arith.addf %229, %231 : vector<8x128xf32>
    %233 = arith.index_cast %226 : i32 to index
    %c0_85 = arith.constant 0 : index
    %c0_86 = arith.constant 0 : index
    %234 = vector.load %arg13[%233, %c0_85, %c0_86] : memref<8x8x128xf32, #tpu.memory_space<vmem>>, vector<1x8x128xf32>
    %235 = vector.shape_cast %234 : vector<1x8x128xf32> to vector<8x128xf32>
    %236 = arith.truncf %215 : vector<8x32xf32> to vector<8x32xbf16>
    %cst_87 = arith.constant dense<0.000000e+00> : vector<8x128xf32>
    %237 = tpu.matmul %236, %26, %cst_87 {dimension_numbers = #tpu.dot_dimension_numbers<[1], [0], [0], [1], [0, 0, 1, 1], [], []>} : vector<8x32xbf16>, vector<32x128xbf16>, vector<8x128xf32> -> vector<8x128xf32>
    %238 = arith.addf %235, %237 : vector<8x128xf32>
    %239 = vector.extract_strided_slice %232 {offsets = [0, 0], sizes = [8, 64], strides = [1, 1]} : vector<8x128xf32> to vector<8x64xf32>
    %240 = arith.negf %239 : vector<8x64xf32>
    %241 = math.exp %240 : vector<8x64xf32>
    %cst_88 = arith.constant 1.000000e+00 : f32
    %242 = vector.broadcast %cst_88 : f32 to vector<8x64xf32>
    %243 = arith.addf %242, %241 : vector<8x64xf32>
    %244 = arith.divf %242, %243 : vector<8x64xf32>
    %245 = vector.extract_strided_slice %232 {offsets = [0, 96], sizes = [8, 32], strides = [1, 1]} : vector<8x128xf32> to vector<8x32xf32>
    %246 = arith.negf %245 : vector<8x32xf32>
    %247 = math.exp %246 : vector<8x32xf32>
    %cst_89 = arith.constant 1.000000e+00 : f32
    %248 = vector.broadcast %cst_89 : f32 to vector<8x32xf32>
    %249 = arith.addf %248, %247 : vector<8x32xf32>
    %250 = arith.divf %248, %249 : vector<8x32xf32>
    %251 = vector.extract_strided_slice %232 {offsets = [0, 64], sizes = [8, 32], strides = [1, 1]} : vector<8x128xf32> to vector<8x32xf32>
    %252 = math.tanh %251 : vector<8x32xf32>
    %253 = vector.extract_strided_slice %244 {offsets = [0, 32], sizes = [8, 32], strides = [1, 1]} : vector<8x64xf32> to vector<8x32xf32>
    %254 = arith.mulf %253, %192 : vector<8x32xf32>
    %255 = vector.extract_strided_slice %244 {offsets = [0, 0], sizes = [8, 32], strides = [1, 1]} : vector<8x64xf32> to vector<8x32xf32>
    %256 = arith.mulf %255, %252 : vector<8x32xf32>
    %257 = arith.addf %254, %256 : vector<8x32xf32>
    %258 = math.tanh %257 : vector<8x32xf32>
    %259 = arith.mulf %250, %258 : vector<8x32xf32>
    %260 = vector.extract_strided_slice %238 {offsets = [0, 0], sizes = [8, 64], strides = [1, 1]} : vector<8x128xf32> to vector<8x64xf32>
    %261 = arith.negf %260 : vector<8x64xf32>
    %262 = math.exp %261 : vector<8x64xf32>
    %cst_90 = arith.constant 1.000000e+00 : f32
    %263 = vector.broadcast %cst_90 : f32 to vector<8x64xf32>
    %264 = arith.addf %263, %262 : vector<8x64xf32>
    %265 = arith.divf %263, %264 : vector<8x64xf32>
    %266 = vector.extract_strided_slice %238 {offsets = [0, 96], sizes = [8, 32], strides = [1, 1]} : vector<8x128xf32> to vector<8x32xf32>
    %267 = arith.negf %266 : vector<8x32xf32>
    %268 = math.exp %267 : vector<8x32xf32>
    %cst_91 = arith.constant 1.000000e+00 : f32
    %269 = vector.broadcast %cst_91 : f32 to vector<8x32xf32>
    %270 = arith.addf %269, %268 : vector<8x32xf32>
    %271 = arith.divf %269, %270 : vector<8x32xf32>
    %272 = vector.extract_strided_slice %238 {offsets = [0, 64], sizes = [8, 32], strides = [1, 1]} : vector<8x128xf32> to vector<8x32xf32>
    %273 = math.tanh %272 : vector<8x32xf32>
    %274 = vector.extract_strided_slice %265 {offsets = [0, 32], sizes = [8, 32], strides = [1, 1]} : vector<8x64xf32> to vector<8x32xf32>
    %275 = arith.mulf %274, %213 : vector<8x32xf32>
    %276 = vector.extract_strided_slice %265 {offsets = [0, 0], sizes = [8, 32], strides = [1, 1]} : vector<8x64xf32> to vector<8x32xf32>
    %277 = arith.mulf %276, %273 : vector<8x32xf32>
    %278 = arith.addf %275, %277 : vector<8x32xf32>
    %279 = math.tanh %278 : vector<8x32xf32>
    %280 = arith.mulf %271, %279 : vector<8x32xf32>
    %281 = arith.truncf %259 : vector<8x32xf32> to vector<8x32xbf16>
    %282 = arith.index_cast %c3_i32 : i32 to index
    %c0_92 = arith.constant 0 : index
    %c0_93 = arith.constant 0 : index
    %283 = vector.load %arg6[%282, %c0_92, %c0_93] : memref<8x8x32xbf16, #tpu.memory_space<vmem>>, vector<1x8x32xbf16>
    %284 = vector.shape_cast %283 : vector<1x8x32xbf16> to vector<8x32xbf16>
    %285 = vector.shape_cast %281 : vector<8x32xbf16> to vector<1x8x32xbf16>
    tpu.vector_store %arg6[%282, %c0_92, %c0_93], %285 {strides = array<i32>} : memref<8x8x32xbf16, #tpu.memory_space<vmem>>, vector<1x8x32xbf16>,
    %286 = arith.truncf %280 : vector<8x32xf32> to vector<8x32xbf16>
    %287 = arith.index_cast %226 : i32 to index
    %c0_94 = arith.constant 0 : index
    %c0_95 = arith.constant 0 : index
    %288 = vector.load %arg7[%287, %c0_94, %c0_95] : memref<8x8x32xbf16, #tpu.memory_space<vmem>>, vector<1x8x32xbf16>
    %289 = vector.shape_cast %288 : vector<1x8x32xbf16> to vector<8x32xbf16>
    %290 = vector.shape_cast %286 : vector<8x32xbf16> to vector<1x8x32xbf16>
    tpu.vector_store %arg7[%287, %c0_94, %c0_95], %290 {strides = array<i32>} : memref<8x8x32xbf16, #tpu.memory_space<vmem>>, vector<1x8x32xbf16>,
    %c4_i32 = arith.constant 4 : i32
    %c7_i32_96 = arith.constant 7 : i32
    %291 = arith.subi %c7_i32_96, %c4_i32 : i32
    %292 = arith.index_cast %c4_i32 : i32 to index
    %c0_97 = arith.constant 0 : index
    %c0_98 = arith.constant 0 : index
    %293 = vector.load %arg12[%292, %c0_97, %c0_98] : memref<8x8x128xf32, #tpu.memory_space<vmem>>, vector<1x8x128xf32>
    %294 = vector.shape_cast %293 : vector<1x8x128xf32> to vector<8x128xf32>
    %295 = arith.truncf %259 : vector<8x32xf32> to vector<8x32xbf16>
    %cst_99 = arith.constant dense<0.000000e+00> : vector<8x128xf32>
    %296 = tpu.matmul %295, %24, %cst_99 {dimension_numbers = #tpu.dot_dimension_numbers<[1], [0], [0], [1], [0, 0, 1, 1], [], []>} : vector<8x32xbf16>, vector<32x128xbf16>, vector<8x128xf32> -> vector<8x128xf32>
    %297 = arith.addf %294, %296 : vector<8x128xf32>
    %298 = arith.index_cast %291 : i32 to index
    %c0_100 = arith.constant 0 : index
    %c0_101 = arith.constant 0 : index
    %299 = vector.load %arg13[%298, %c0_100, %c0_101] : memref<8x8x128xf32, #tpu.memory_space<vmem>>, vector<1x8x128xf32>
    %300 = vector.shape_cast %299 : vector<1x8x128xf32> to vector<8x128xf32>
    %301 = arith.truncf %280 : vector<8x32xf32> to vector<8x32xbf16>
    %cst_102 = arith.constant dense<0.000000e+00> : vector<8x128xf32>
    %302 = tpu.matmul %301, %26, %cst_102 {dimension_numbers = #tpu.dot_dimension_numbers<[1], [0], [0], [1], [0, 0, 1, 1], [], []>} : vector<8x32xbf16>, vector<32x128xbf16>, vector<8x128xf32> -> vector<8x128xf32>
    %303 = arith.addf %300, %302 : vector<8x128xf32>
    %304 = vector.extract_strided_slice %297 {offsets = [0, 0], sizes = [8, 64], strides = [1, 1]} : vector<8x128xf32> to vector<8x64xf32>
    %305 = arith.negf %304 : vector<8x64xf32>
    %306 = math.exp %305 : vector<8x64xf32>
    %cst_103 = arith.constant 1.000000e+00 : f32
    %307 = vector.broadcast %cst_103 : f32 to vector<8x64xf32>
    %308 = arith.addf %307, %306 : vector<8x64xf32>
    %309 = arith.divf %307, %308 : vector<8x64xf32>
    %310 = vector.extract_strided_slice %297 {offsets = [0, 96], sizes = [8, 32], strides = [1, 1]} : vector<8x128xf32> to vector<8x32xf32>
    %311 = arith.negf %310 : vector<8x32xf32>
    %312 = math.exp %311 : vector<8x32xf32>
    %cst_104 = arith.constant 1.000000e+00 : f32
    %313 = vector.broadcast %cst_104 : f32 to vector<8x32xf32>
    %314 = arith.addf %313, %312 : vector<8x32xf32>
    %315 = arith.divf %313, %314 : vector<8x32xf32>
    %316 = vector.extract_strided_slice %297 {offsets = [0, 64], sizes = [8, 32], strides = [1, 1]} : vector<8x128xf32> to vector<8x32xf32>
    %317 = math.tanh %316 : vector<8x32xf32>
    %318 = vector.extract_strided_slice %309 {offsets = [0, 32], sizes = [8, 32], strides = [1, 1]} : vector<8x64xf32> to vector<8x32xf32>
    %319 = arith.mulf %318, %257 : vector<8x32xf32>
    %320 = vector.extract_strided_slice %309 {offsets = [0, 0], sizes = [8, 32], strides = [1, 1]} : vector<8x64xf32> to vector<8x32xf32>
    %321 = arith.mulf %320, %317 : vector<8x32xf32>
    %322 = arith.addf %319, %321 : vector<8x32xf32>
    %323 = math.tanh %322 : vector<8x32xf32>
    %324 = arith.mulf %315, %323 : vector<8x32xf32>
    %325 = vector.extract_strided_slice %303 {offsets = [0, 0], sizes = [8, 64], strides = [1, 1]} : vector<8x128xf32> to vector<8x64xf32>
    %326 = arith.negf %325 : vector<8x64xf32>
    %327 = math.exp %326 : vector<8x64xf32>
    %cst_105 = arith.constant 1.000000e+00 : f32
    %328 = vector.broadcast %cst_105 : f32 to vector<8x64xf32>
    %329 = arith.addf %328, %327 : vector<8x64xf32>
    %330 = arith.divf %328, %329 : vector<8x64xf32>
    %331 = vector.extract_strided_slice %303 {offsets = [0, 96], sizes = [8, 32], strides = [1, 1]} : vector<8x128xf32> to vector<8x32xf32>
    %332 = arith.negf %331 : vector<8x32xf32>
    %333 = math.exp %332 : vector<8x32xf32>
    %cst_106 = arith.constant 1.000000e+00 : f32
    %334 = vector.broadcast %cst_106 : f32 to vector<8x32xf32>
    %335 = arith.addf %334, %333 : vector<8x32xf32>
    %336 = arith.divf %334, %335 : vector<8x32xf32>
    %337 = vector.extract_strided_slice %303 {offsets = [0, 64], sizes = [8, 32], strides = [1, 1]} : vector<8x128xf32> to vector<8x32xf32>
    %338 = math.tanh %337 : vector<8x32xf32>
    %339 = vector.extract_strided_slice %330 {offsets = [0, 32], sizes = [8, 32], strides = [1, 1]} : vector<8x64xf32> to vector<8x32xf32>
    %340 = arith.mulf %339, %278 : vector<8x32xf32>
    %341 = vector.extract_strided_slice %330 {offsets = [0, 0], sizes = [8, 32], strides = [1, 1]} : vector<8x64xf32> to vector<8x32xf32>
    %342 = arith.mulf %341, %338 : vector<8x32xf32>
    %343 = arith.addf %340, %342 : vector<8x32xf32>
    %344 = math.tanh %343 : vector<8x32xf32>
    %345 = arith.mulf %336, %344 : vector<8x32xf32>
    %346 = arith.truncf %324 : vector<8x32xf32> to vector<8x32xbf16>
    %347 = arith.index_cast %c4_i32 : i32 to index
    %c0_107 = arith.constant 0 : index
    %c0_108 = arith.constant 0 : index
    %348 = vector.load %arg6[%347, %c0_107, %c0_108] : memref<8x8x32xbf16, #tpu.memory_space<vmem>>, vector<1x8x32xbf16>
    %349 = vector.shape_cast %348 : vector<1x8x32xbf16> to vector<8x32xbf16>
    %350 = vector.shape_cast %346 : vector<8x32xbf16> to vector<1x8x32xbf16>
    tpu.vector_store %arg6[%347, %c0_107, %c0_108], %350 {strides = array<i32>} : memref<8x8x32xbf16, #tpu.memory_space<vmem>>, vector<1x8x32xbf16>,
    %351 = arith.truncf %345 : vector<8x32xf32> to vector<8x32xbf16>
    %352 = arith.index_cast %291 : i32 to index
    %c0_109 = arith.constant 0 : index
    %c0_110 = arith.constant 0 : index
    %353 = vector.load %arg7[%352, %c0_109, %c0_110] : memref<8x8x32xbf16, #tpu.memory_space<vmem>>, vector<1x8x32xbf16>
    %354 = vector.shape_cast %353 : vector<1x8x32xbf16> to vector<8x32xbf16>
    %355 = vector.shape_cast %351 : vector<8x32xbf16> to vector<1x8x32xbf16>
    tpu.vector_store %arg7[%352, %c0_109, %c0_110], %355 {strides = array<i32>} : memref<8x8x32xbf16, #tpu.memory_space<vmem>>, vector<1x8x32xbf16>,
    %c5_i32 = arith.constant 5 : i32
    %c7_i32_111 = arith.constant 7 : i32
    %356 = arith.subi %c7_i32_111, %c5_i32 : i32
    %357 = arith.index_cast %c5_i32 : i32 to index
    %c0_112 = arith.constant 0 : index
    %c0_113 = arith.constant 0 : index
    %358 = vector.load %arg12[%357, %c0_112, %c0_113] : memref<8x8x128xf32, #tpu.memory_space<vmem>>, vector<1x8x128xf32>
    %359 = vector.shape_cast %358 : vector<1x8x128xf32> to vector<8x128xf32>
    %360 = arith.truncf %324 : vector<8x32xf32> to vector<8x32xbf16>
    %cst_114 = arith.constant dense<0.000000e+00> : vector<8x128xf32>
    %361 = tpu.matmul %360, %24, %cst_114 {dimension_numbers = #tpu.dot_dimension_numbers<[1], [0], [0], [1], [0, 0, 1, 1], [], []>} : vector<8x32xbf16>, vector<32x128xbf16>, vector<8x128xf32> -> vector<8x128xf32>
    %362 = arith.addf %359, %361 : vector<8x128xf32>
    %363 = arith.index_cast %356 : i32 to index
    %c0_115 = arith.constant 0 : index
    %c0_116 = arith.constant 0 : index
    %364 = vector.load %arg13[%363, %c0_115, %c0_116] : memref<8x8x128xf32, #tpu.memory_space<vmem>>, vector<1x8x128xf32>
    %365 = vector.shape_cast %364 : vector<1x8x128xf32> to vector<8x128xf32>
    %366 = arith.truncf %345 : vector<8x32xf32> to vector<8x32xbf16>
    %cst_117 = arith.constant dense<0.000000e+00> : vector<8x128xf32>
    %367 = tpu.matmul %366, %26, %cst_117 {dimension_numbers = #tpu.dot_dimension_numbers<[1], [0], [0], [1], [0, 0, 1, 1], [], []>} : vector<8x32xbf16>, vector<32x128xbf16>, vector<8x128xf32> -> vector<8x128xf32>
    %368 = arith.addf %365, %367 : vector<8x128xf32>
    %369 = vector.extract_strided_slice %362 {offsets = [0, 0], sizes = [8, 64], strides = [1, 1]} : vector<8x128xf32> to vector<8x64xf32>
    %370 = arith.negf %369 : vector<8x64xf32>
    %371 = math.exp %370 : vector<8x64xf32>
    %cst_118 = arith.constant 1.000000e+00 : f32
    %372 = vector.broadcast %cst_118 : f32 to vector<8x64xf32>
    %373 = arith.addf %372, %371 : vector<8x64xf32>
    %374 = arith.divf %372, %373 : vector<8x64xf32>
    %375 = vector.extract_strided_slice %362 {offsets = [0, 96], sizes = [8, 32], strides = [1, 1]} : vector<8x128xf32> to vector<8x32xf32>
    %376 = arith.negf %375 : vector<8x32xf32>
    %377 = math.exp %376 : vector<8x32xf32>
    %cst_119 = arith.constant 1.000000e+00 : f32
    %378 = vector.broadcast %cst_119 : f32 to vector<8x32xf32>
    %379 = arith.addf %378, %377 : vector<8x32xf32>
    %380 = arith.divf %378, %379 : vector<8x32xf32>
    %381 = vector.extract_strided_slice %362 {offsets = [0, 64], sizes = [8, 32], strides = [1, 1]} : vector<8x128xf32> to vector<8x32xf32>
    %382 = math.tanh %381 : vector<8x32xf32>
    %383 = vector.extract_strided_slice %374 {offsets = [0, 32], sizes = [8, 32], strides = [1, 1]} : vector<8x64xf32> to vector<8x32xf32>
    %384 = arith.mulf %383, %322 : vector<8x32xf32>
    %385 = vector.extract_strided_slice %374 {offsets = [0, 0], sizes = [8, 32], strides = [1, 1]} : vector<8x64xf32> to vector<8x32xf32>
    %386 = arith.mulf %385, %382 : vector<8x32xf32>
    %387 = arith.addf %384, %386 : vector<8x32xf32>
    %388 = math.tanh %387 : vector<8x32xf32>
    %389 = arith.mulf %380, %388 : vector<8x32xf32>
    %390 = vector.extract_strided_slice %368 {offsets = [0, 0], sizes = [8, 64], strides = [1, 1]} : vector<8x128xf32> to vector<8x64xf32>
    %391 = arith.negf %390 : vector<8x64xf32>
    %392 = math.exp %391 : vector<8x64xf32>
    %cst_120 = arith.constant 1.000000e+00 : f32
    %393 = vector.broadcast %cst_120 : f32 to vector<8x64xf32>
    %394 = arith.addf %393, %392 : vector<8x64xf32>
    %395 = arith.divf %393, %394 : vector<8x64xf32>
    %396 = vector.extract_strided_slice %368 {offsets = [0, 96], sizes = [8, 32], strides = [1, 1]} : vector<8x128xf32> to vector<8x32xf32>
    %397 = arith.negf %396 : vector<8x32xf32>
    %398 = math.exp %397 : vector<8x32xf32>
    %cst_121 = arith.constant 1.000000e+00 : f32
    %399 = vector.broadcast %cst_121 : f32 to vector<8x32xf32>
    %400 = arith.addf %399, %398 : vector<8x32xf32>
    %401 = arith.divf %399, %400 : vector<8x32xf32>
    %402 = vector.extract_strided_slice %368 {offsets = [0, 64], sizes = [8, 32], strides = [1, 1]} : vector<8x128xf32> to vector<8x32xf32>
    %403 = math.tanh %402 : vector<8x32xf32>
    %404 = vector.extract_strided_slice %395 {offsets = [0, 32], sizes = [8, 32], strides = [1, 1]} : vector<8x64xf32> to vector<8x32xf32>
    %405 = arith.mulf %404, %343 : vector<8x32xf32>
    %406 = vector.extract_strided_slice %395 {offsets = [0, 0], sizes = [8, 32], strides = [1, 1]} : vector<8x64xf32> to vector<8x32xf32>
    %407 = arith.mulf %406, %403 : vector<8x32xf32>
    %408 = arith.addf %405, %407 : vector<8x32xf32>
    %409 = math.tanh %408 : vector<8x32xf32>
    %410 = arith.mulf %401, %409 : vector<8x32xf32>
    %411 = arith.truncf %389 : vector<8x32xf32> to vector<8x32xbf16>
    %412 = arith.index_cast %c5_i32 : i32 to index
    %c0_122 = arith.constant 0 : index
    %c0_123 = arith.constant 0 : index
    %413 = vector.load %arg6[%412, %c0_122, %c0_123] : memref<8x8x32xbf16, #tpu.memory_space<vmem>>, vector<1x8x32xbf16>
    %414 = vector.shape_cast %413 : vector<1x8x32xbf16> to vector<8x32xbf16>
    %415 = vector.shape_cast %411 : vector<8x32xbf16> to vector<1x8x32xbf16>
    tpu.vector_store %arg6[%412, %c0_122, %c0_123], %415 {strides = array<i32>} : memref<8x8x32xbf16, #tpu.memory_space<vmem>>, vector<1x8x32xbf16>,
    %416 = arith.truncf %410 : vector<8x32xf32> to vector<8x32xbf16>
    %417 = arith.index_cast %356 : i32 to index
    %c0_124 = arith.constant 0 : index
    %c0_125 = arith.constant 0 : index
    %418 = vector.load %arg7[%417, %c0_124, %c0_125] : memref<8x8x32xbf16, #tpu.memory_space<vmem>>, vector<1x8x32xbf16>
    %419 = vector.shape_cast %418 : vector<1x8x32xbf16> to vector<8x32xbf16>
    %420 = vector.shape_cast %416 : vector<8x32xbf16> to vector<1x8x32xbf16>
    tpu.vector_store %arg7[%417, %c0_124, %c0_125], %420 {strides = array<i32>} : memref<8x8x32xbf16, #tpu.memory_space<vmem>>, vector<1x8x32xbf16>,
    %c6_i32 = arith.constant 6 : i32
    %c7_i32_126 = arith.constant 7 : i32
    %421 = arith.subi %c7_i32_126, %c6_i32 : i32
    %422 = arith.index_cast %c6_i32 : i32 to index
    %c0_127 = arith.constant 0 : index
    %c0_128 = arith.constant 0 : index
    %423 = vector.load %arg12[%422, %c0_127, %c0_128] : memref<8x8x128xf32, #tpu.memory_space<vmem>>, vector<1x8x128xf32>
    %424 = vector.shape_cast %423 : vector<1x8x128xf32> to vector<8x128xf32>
    %425 = arith.truncf %389 : vector<8x32xf32> to vector<8x32xbf16>
    %cst_129 = arith.constant dense<0.000000e+00> : vector<8x128xf32>
    %426 = tpu.matmul %425, %24, %cst_129 {dimension_numbers = #tpu.dot_dimension_numbers<[1], [0], [0], [1], [0, 0, 1, 1], [], []>} : vector<8x32xbf16>, vector<32x128xbf16>, vector<8x128xf32> -> vector<8x128xf32>
    %427 = arith.addf %424, %426 : vector<8x128xf32>
    %428 = arith.index_cast %421 : i32 to index
    %c0_130 = arith.constant 0 : index
    %c0_131 = arith.constant 0 : index
    %429 = vector.load %arg13[%428, %c0_130, %c0_131] : memref<8x8x128xf32, #tpu.memory_space<vmem>>, vector<1x8x128xf32>
    %430 = vector.shape_cast %429 : vector<1x8x128xf32> to vector<8x128xf32>
    %431 = arith.truncf %410 : vector<8x32xf32> to vector<8x32xbf16>
    %cst_132 = arith.constant dense<0.000000e+00> : vector<8x128xf32>
    %432 = tpu.matmul %431, %26, %cst_132 {dimension_numbers = #tpu.dot_dimension_numbers<[1], [0], [0], [1], [0, 0, 1, 1], [], []>} : vector<8x32xbf16>, vector<32x128xbf16>, vector<8x128xf32> -> vector<8x128xf32>
    %433 = arith.addf %430, %432 : vector<8x128xf32>
    %434 = vector.extract_strided_slice %427 {offsets = [0, 0], sizes = [8, 64], strides = [1, 1]} : vector<8x128xf32> to vector<8x64xf32>
    %435 = arith.negf %434 : vector<8x64xf32>
    %436 = math.exp %435 : vector<8x64xf32>
    %cst_133 = arith.constant 1.000000e+00 : f32
    %437 = vector.broadcast %cst_133 : f32 to vector<8x64xf32>
    %438 = arith.addf %437, %436 : vector<8x64xf32>
    %439 = arith.divf %437, %438 : vector<8x64xf32>
    %440 = vector.extract_strided_slice %427 {offsets = [0, 96], sizes = [8, 32], strides = [1, 1]} : vector<8x128xf32> to vector<8x32xf32>
    %441 = arith.negf %440 : vector<8x32xf32>
    %442 = math.exp %441 : vector<8x32xf32>
    %cst_134 = arith.constant 1.000000e+00 : f32
    %443 = vector.broadcast %cst_134 : f32 to vector<8x32xf32>
    %444 = arith.addf %443, %442 : vector<8x32xf32>
    %445 = arith.divf %443, %444 : vector<8x32xf32>
    %446 = vector.extract_strided_slice %427 {offsets = [0, 64], sizes = [8, 32], strides = [1, 1]} : vector<8x128xf32> to vector<8x32xf32>
    %447 = math.tanh %446 : vector<8x32xf32>
    %448 = vector.extract_strided_slice %439 {offsets = [0, 32], sizes = [8, 32], strides = [1, 1]} : vector<8x64xf32> to vector<8x32xf32>
    %449 = arith.mulf %448, %387 : vector<8x32xf32>
    %450 = vector.extract_strided_slice %439 {offsets = [0, 0], sizes = [8, 32], strides = [1, 1]} : vector<8x64xf32> to vector<8x32xf32>
    %451 = arith.mulf %450, %447 : vector<8x32xf32>
    %452 = arith.addf %449, %451 : vector<8x32xf32>
    %453 = math.tanh %452 : vector<8x32xf32>
    %454 = arith.mulf %445, %453 : vector<8x32xf32>
    %455 = vector.extract_strided_slice %433 {offsets = [0, 0], sizes = [8, 64], strides = [1, 1]} : vector<8x128xf32> to vector<8x64xf32>
    %456 = arith.negf %455 : vector<8x64xf32>
    %457 = math.exp %456 : vector<8x64xf32>
    %cst_135 = arith.constant 1.000000e+00 : f32
    %458 = vector.broadcast %cst_135 : f32 to vector<8x64xf32>
    %459 = arith.addf %458, %457 : vector<8x64xf32>
    %460 = arith.divf %458, %459 : vector<8x64xf32>
    %461 = vector.extract_strided_slice %433 {offsets = [0, 96], sizes = [8, 32], strides = [1, 1]} : vector<8x128xf32> to vector<8x32xf32>
    %462 = arith.negf %461 : vector<8x32xf32>
    %463 = math.exp %462 : vector<8x32xf32>
    %cst_136 = arith.constant 1.000000e+00 : f32
    %464 = vector.broadcast %cst_136 : f32 to vector<8x32xf32>
    %465 = arith.addf %464, %463 : vector<8x32xf32>
    %466 = arith.divf %464, %465 : vector<8x32xf32>
    %467 = vector.extract_strided_slice %433 {offsets = [0, 64], sizes = [8, 32], strides = [1, 1]} : vector<8x128xf32> to vector<8x32xf32>
    %468 = math.tanh %467 : vector<8x32xf32>
    %469 = vector.extract_strided_slice %460 {offsets = [0, 32], sizes = [8, 32], strides = [1, 1]} : vector<8x64xf32> to vector<8x32xf32>
    %470 = arith.mulf %469, %408 : vector<8x32xf32>
    %471 = vector.extract_strided_slice %460 {offsets = [0, 0], sizes = [8, 32], strides = [1, 1]} : vector<8x64xf32> to vector<8x32xf32>
    %472 = arith.mulf %471, %468 : vector<8x32xf32>
    %473 = arith.addf %470, %472 : vector<8x32xf32>
    %474 = math.tanh %473 : vector<8x32xf32>
    %475 = arith.mulf %466, %474 : vector<8x32xf32>
    %476 = arith.truncf %454 : vector<8x32xf32> to vector<8x32xbf16>
    %477 = arith.index_cast %c6_i32 : i32 to index
    %c0_137 = arith.constant 0 : index
    %c0_138 = arith.constant 0 : index
    %478 = vector.load %arg6[%477, %c0_137, %c0_138] : memref<8x8x32xbf16, #tpu.memory_space<vmem>>, vector<1x8x32xbf16>
    %479 = vector.shape_cast %478 : vector<1x8x32xbf16> to vector<8x32xbf16>
    %480 = vector.shape_cast %476 : vector<8x32xbf16> to vector<1x8x32xbf16>
    tpu.vector_store %arg6[%477, %c0_137, %c0_138], %480 {strides = array<i32>} : memref<8x8x32xbf16, #tpu.memory_space<vmem>>, vector<1x8x32xbf16>,
    %481 = arith.truncf %475 : vector<8x32xf32> to vector<8x32xbf16>
    %482 = arith.index_cast %421 : i32 to index
    %c0_139 = arith.constant 0 : index
    %c0_140 = arith.constant 0 : index
    %483 = vector.load %arg7[%482, %c0_139, %c0_140] : memref<8x8x32xbf16, #tpu.memory_space<vmem>>, vector<1x8x32xbf16>
    %484 = vector.shape_cast %483 : vector<1x8x32xbf16> to vector<8x32xbf16>
    %485 = vector.shape_cast %481 : vector<8x32xbf16> to vector<1x8x32xbf16>
    tpu.vector_store %arg7[%482, %c0_139, %c0_140], %485 {strides = array<i32>} : memref<8x8x32xbf16, #tpu.memory_space<vmem>>, vector<1x8x32xbf16>,
    %c7_i32_141 = arith.constant 7 : i32
    %c7_i32_142 = arith.constant 7 : i32
    %486 = arith.subi %c7_i32_142, %c7_i32_141 : i32
    %487 = arith.index_cast %c7_i32_141 : i32 to index
    %c0_143 = arith.constant 0 : index
    %c0_144 = arith.constant 0 : index
    %488 = vector.load %arg12[%487, %c0_143, %c0_144] : memref<8x8x128xf32, #tpu.memory_space<vmem>>, vector<1x8x128xf32>
    %489 = vector.shape_cast %488 : vector<1x8x128xf32> to vector<8x128xf32>
    %490 = arith.truncf %454 : vector<8x32xf32> to vector<8x32xbf16>
    %cst_145 = arith.constant dense<0.000000e+00> : vector<8x128xf32>
    %491 = tpu.matmul %490, %24, %cst_145 {dimension_numbers = #tpu.dot_dimension_numbers<[1], [0], [0], [1], [0, 0, 1, 1], [], []>} : vector<8x32xbf16>, vector<32x128xbf16>, vector<8x128xf32> -> vector<8x128xf32>
    %492 = arith.addf %489, %491 : vector<8x128xf32>
    %493 = arith.index_cast %486 : i32 to index
    %c0_146 = arith.constant 0 : index
    %c0_147 = arith.constant 0 : index
    %494 = vector.load %arg13[%493, %c0_146, %c0_147] : memref<8x8x128xf32, #tpu.memory_space<vmem>>, vector<1x8x128xf32>
    %495 = vector.shape_cast %494 : vector<1x8x128xf32> to vector<8x128xf32>
    %496 = arith.truncf %475 : vector<8x32xf32> to vector<8x32xbf16>
    %cst_148 = arith.constant dense<0.000000e+00> : vector<8x128xf32>
    %497 = tpu.matmul %496, %26, %cst_148 {dimension_numbers = #tpu.dot_dimension_numbers<[1], [0], [0], [1], [0, 0, 1, 1], [], []>} : vector<8x32xbf16>, vector<32x128xbf16>, vector<8x128xf32> -> vector<8x128xf32>
    %498 = arith.addf %495, %497 : vector<8x128xf32>
    %499 = vector.extract_strided_slice %492 {offsets = [0, 0], sizes = [8, 64], strides = [1, 1]} : vector<8x128xf32> to vector<8x64xf32>
    %500 = arith.negf %499 : vector<8x64xf32>
    %501 = math.exp %500 : vector<8x64xf32>
    %cst_149 = arith.constant 1.000000e+00 : f32
    %502 = vector.broadcast %cst_149 : f32 to vector<8x64xf32>
    %503 = arith.addf %502, %501 : vector<8x64xf32>
    %504 = arith.divf %502, %503 : vector<8x64xf32>
    %505 = vector.extract_strided_slice %492 {offsets = [0, 96], sizes = [8, 32], strides = [1, 1]} : vector<8x128xf32> to vector<8x32xf32>
    %506 = arith.negf %505 : vector<8x32xf32>
    %507 = math.exp %506 : vector<8x32xf32>
    %cst_150 = arith.constant 1.000000e+00 : f32
    %508 = vector.broadcast %cst_150 : f32 to vector<8x32xf32>
    %509 = arith.addf %508, %507 : vector<8x32xf32>
    %510 = arith.divf %508, %509 : vector<8x32xf32>
    %511 = vector.extract_strided_slice %492 {offsets = [0, 64], sizes = [8, 32], strides = [1, 1]} : vector<8x128xf32> to vector<8x32xf32>
    %512 = math.tanh %511 : vector<8x32xf32>
    %513 = vector.extract_strided_slice %504 {offsets = [0, 32], sizes = [8, 32], strides = [1, 1]} : vector<8x64xf32> to vector<8x32xf32>
    %514 = arith.mulf %513, %452 : vector<8x32xf32>
    %515 = vector.extract_strided_slice %504 {offsets = [0, 0], sizes = [8, 32], strides = [1, 1]} : vector<8x64xf32> to vector<8x32xf32>
    %516 = arith.mulf %515, %512 : vector<8x32xf32>
    %517 = arith.addf %514, %516 : vector<8x32xf32>
    %518 = math.tanh %517 : vector<8x32xf32>
    %519 = arith.mulf %510, %518 : vector<8x32xf32>
    %520 = vector.extract_strided_slice %498 {offsets = [0, 0], sizes = [8, 64], strides = [1, 1]} : vector<8x128xf32> to vector<8x64xf32>
    %521 = arith.negf %520 : vector<8x64xf32>
    %522 = math.exp %521 : vector<8x64xf32>
    %cst_151 = arith.constant 1.000000e+00 : f32
    %523 = vector.broadcast %cst_151 : f32 to vector<8x64xf32>
    %524 = arith.addf %523, %522 : vector<8x64xf32>
    %525 = arith.divf %523, %524 : vector<8x64xf32>
    %526 = vector.extract_strided_slice %498 {offsets = [0, 96], sizes = [8, 32], strides = [1, 1]} : vector<8x128xf32> to vector<8x32xf32>
    %527 = arith.negf %526 : vector<8x32xf32>
    %528 = math.exp %527 : vector<8x32xf32>
    %cst_152 = arith.constant 1.000000e+00 : f32
    %529 = vector.broadcast %cst_152 : f32 to vector<8x32xf32>
    %530 = arith.addf %529, %528 : vector<8x32xf32>
    %531 = arith.divf %529, %530 : vector<8x32xf32>
    %532 = vector.extract_strided_slice %498 {offsets = [0, 64], sizes = [8, 32], strides = [1, 1]} : vector<8x128xf32> to vector<8x32xf32>
    %533 = math.tanh %532 : vector<8x32xf32>
    %534 = vector.extract_strided_slice %525 {offsets = [0, 32], sizes = [8, 32], strides = [1, 1]} : vector<8x64xf32> to vector<8x32xf32>
    %535 = arith.mulf %534, %473 : vector<8x32xf32>
    %536 = vector.extract_strided_slice %525 {offsets = [0, 0], sizes = [8, 32], strides = [1, 1]} : vector<8x64xf32> to vector<8x32xf32>
    %537 = arith.mulf %536, %533 : vector<8x32xf32>
    %538 = arith.addf %535, %537 : vector<8x32xf32>
    %539 = math.tanh %538 : vector<8x32xf32>
    %540 = arith.mulf %531, %539 : vector<8x32xf32>
    %541 = arith.truncf %519 : vector<8x32xf32> to vector<8x32xbf16>
    %542 = arith.index_cast %c7_i32_141 : i32 to index
    %c0_153 = arith.constant 0 : index
    %c0_154 = arith.constant 0 : index
    %543 = vector.load %arg6[%542, %c0_153, %c0_154] : memref<8x8x32xbf16, #tpu.memory_space<vmem>>, vector<1x8x32xbf16>
    %544 = vector.shape_cast %543 : vector<1x8x32xbf16> to vector<8x32xbf16>
    %545 = vector.shape_cast %541 : vector<8x32xbf16> to vector<1x8x32xbf16>
    tpu.vector_store %arg6[%542, %c0_153, %c0_154], %545 {strides = array<i32>} : memref<8x8x32xbf16, #tpu.memory_space<vmem>>, vector<1x8x32xbf16>,
    %546 = arith.truncf %540 : vector<8x32xf32> to vector<8x32xbf16>
    %547 = arith.index_cast %486 : i32 to index
    %c0_155 = arith.constant 0 : index
    %c0_156 = arith.constant 0 : index
    %548 = vector.load %arg7[%547, %c0_155, %c0_156] : memref<8x8x32xbf16, #tpu.memory_space<vmem>>, vector<1x8x32xbf16>
    %549 = vector.shape_cast %548 : vector<1x8x32xbf16> to vector<8x32xbf16>
    %550 = vector.shape_cast %546 : vector<8x32xbf16> to vector<1x8x32xbf16>
    tpu.vector_store %arg7[%547, %c0_155, %c0_156], %550 {strides = array<i32>} : memref<8x8x32xbf16, #tpu.memory_space<vmem>>, vector<1x8x32xbf16>,
    %c8_i32 = arith.constant 8 : i32
    %c0_157 = arith.constant 0 : index
    %c0_158 = arith.constant 0 : index
    %551 = vector.load %arg8[%c0_157, %c0_158] : memref<8x32xf32, #tpu.memory_space<vmem>>, vector<8x32xf32>
    tpu.vector_store %arg8[%c0_157, %c0_158], %519 {strides = array<i32>} : memref<8x32xf32, #tpu.memory_space<vmem>>, vector<8x32xf32>,
    %c0_159 = arith.constant 0 : index
    %c0_160 = arith.constant 0 : index
    %552 = vector.load %arg9[%c0_159, %c0_160] : memref<8x32xf32, #tpu.memory_space<vmem>>, vector<8x32xf32>
    tpu.vector_store %arg9[%c0_159, %c0_160], %517 {strides = array<i32>} : memref<8x32xf32, #tpu.memory_space<vmem>>, vector<8x32xf32>,
    %c0_161 = arith.constant 0 : index
    %c0_162 = arith.constant 0 : index
    %553 = vector.load %arg10[%c0_161, %c0_162] : memref<8x32xf32, #tpu.memory_space<vmem>>, vector<8x32xf32>
    tpu.vector_store %arg10[%c0_161, %c0_162], %540 {strides = array<i32>} : memref<8x32xf32, #tpu.memory_space<vmem>>, vector<8x32xf32>,
    %c0_163 = arith.constant 0 : index
    %c0_164 = arith.constant 0 : index
    %554 = vector.load %arg11[%c0_163, %c0_164] : memref<8x32xf32, #tpu.memory_space<vmem>>, vector<8x32xf32>
    tpu.vector_store %arg11[%c0_163, %c0_164], %538 {strides = array<i32>} : memref<8x32xf32, #tpu.memory_space<vmem>>, vector<8x32xf32>,
    return
  }
  func.func @transform_0(%arg0: i32) -> (i32, i32) {
    %c0_i32 = arith.constant 0 : i32
    %c0_i32_0 = arith.constant 0 : i32
    return %arg0, %c0_i32 : i32, i32
  }
  func.func @transform_1(%arg0: i32) -> (i32, i32) {
    %c0_i32 = arith.constant 0 : i32
    %0 = arith.subi %c0_i32, %arg0 : i32
    %c0_i32_0 = arith.constant 0 : i32
    %c0_i32_1 = arith.constant 0 : i32
    return %0, %c0_i32_0 : i32, i32
  }
  func.func @transform_2(%arg0: i32) -> (i32, i32, i32) {
    %c0_i32 = arith.constant 0 : i32
    %c0_i32_0 = arith.constant 0 : i32
    %c0_i32_1 = arith.constant 0 : i32
    %c0_i32_2 = arith.constant 0 : i32
    return %c0_i32, %c0_i32_0, %c0_i32_1 : i32, i32, i32
  }
  func.func @transform_3(%arg0: i32) -> (i32, i32, i32) {
    %c0_i32 = arith.constant 0 : i32
    %c0_i32_0 = arith.constant 0 : i32
    %c0_i32_1 = arith.constant 0 : i32
    %c0_i32_2 = arith.constant 0 : i32
    return %c0_i32, %c0_i32_0, %c0_i32_1 : i32, i32, i32
  }
  func.func @transform_4(%arg0: i32) -> (i32, i32, i32) {
    %c0_i32 = arith.constant 0 : i32
    %c0_i32_0 = arith.constant 0 : i32
    %c0_i32_1 = arith.constant 0 : i32
    %c0_i32_2 = arith.constant 0 : i32
    return %c0_i32, %c0_i32_0, %c0_i32_1 : i32, i32, i32
  }
  func.func @transform_5(%arg0: i32) -> (i32, i32, i32) {
    %c0_i32 = arith.constant 0 : i32
    %c0_i32_0 = arith.constant 0 : i32
    %c0_i32_1 = arith.constant 0 : i32
    return %arg0, %c0_i32, %c0_i32_0 : i32, i32, i32
  }
  func.func @transform_6(%arg0: i32) -> (i32, i32, i32) {
    %c0_i32 = arith.constant 0 : i32
    %0 = arith.subi %c0_i32, %arg0 : i32
    %c0_i32_0 = arith.constant 0 : i32
    %c0_i32_1 = arith.constant 0 : i32
    %c0_i32_2 = arith.constant 0 : i32
    return %0, %c0_i32_0, %c0_i32_1 : i32, i32, i32
  }
}

</mosaic_0001>

<llo_original>
// kernel: tpu_custom_call.1
$region0: #{tpu_custom_call.1}
  #allocation0 [shape = 'u32[]', space=smem, size = 0x4, offset = 0x4, fixed_abs, tag = 'smem constant byte address 0x4 - core index']
  #allocation1 [shape = 'u32[144,128]{1,0:T(1,128)}', space=vmem, size = 0x12000, scoped, tag = 'internal scratch']
  #allocation2 [shape = 'f32[8,32]{1,0:T(8,128)}', space=vmem, size = 0x1000, scoped, tag = 'scratch operand']
  #allocation3 [shape = 'f32[8,32]{1,0:T(8,128)}', space=vmem, size = 0x1000, scoped, tag = 'scratch operand']
  #allocation4 [shape = 'f32[8,32]{1,0:T(8,128)}', space=vmem, size = 0x1000, scoped, tag = 'scratch operand']
  #allocation5 [shape = 'f32[8,32]{1,0:T(8,128)}', space=vmem, size = 0x1000, scoped, tag = 'scratch operand']
  #allocation6 [shape = 'f32[8,8,128]{2,1,0:T(8,128)}', space=vmem, size = 0x8000, scoped, tag = 'scratch operand']
  #allocation7 [shape = 'f32[8,8,128]{2,1,0:T(8,128)}', space=vmem, size = 0x8000, scoped, tag = 'scratch operand']
  %s0 = inlined_call_operand.vmem [shape: bf16[64,16], index: 0, kind: input, shape index: {}]
  %s1 = inlined_call_operand.vmem [shape: bf16[64,16], index: 1, kind: input, shape index: {}]
  %s2 = inlined_call_operand.vmem [shape: bf16[2,16,128], index: 2, kind: input, shape index: {}]
  %s3 = inlined_call_operand.vmem [shape: bf16[2,32,128], index: 3, kind: input, shape index: {}]
  %s4 = inlined_call_operand.vmem [shape: f32[2,1,128], index: 4, kind: input, shape index: {}]
  %s5 = inlined_call_operand.hbm [shape: bf16[8,8,32], index: 5, kind: output, shape index: {0}]
  %s6 = inlined_call_operand.hbm [shape: bf16[8,8,32], index: 6, kind: output, shape index: {1}]
  %7 = xla_tuple %s5, %s6
  %s8 = sld [smem:[#allocation0]]
  $region42: #{tpu_custom_call.1} parent=0
    _
  %s10 = ssub.s32 1, %s8
  %s11 = scalar_select 0, %s10, %s8
  $region1: #{tpu_custom_call.1} parent=0
    #allocation8 [shape = 'u8[16384]{0}', space=vmem, size = 0x4000, scoped, tag = 'output window, operand 0, single buffered']
    #allocation9 [shape = 's32[1]{0}', space=sflag, size = 0x4, scoped, tag = 'scoped memory for tpu_custom_call.1']
    #allocation10 [shape = 'u8[16384]{0}', space=vmem, size = 0x4000, scoped, tag = 'output window, operand 1, single buffered']
    #allocation11 [shape = 's32[1]{0}', space=sflag, size = 0x4, scoped, tag = 'scoped memory for tpu_custom_call.1']
    %12 = vsyncpa [#allocation9], 0
    %13 = vsyncpa [#allocation11], 0
    // Predicated region
    $region2: #{tpu_custom_call.1} parent=1 // pred_check
      _
    $region3: #{tpu_custom_call.1} parent=1 // pred_check_branch
      %15 = sbr.rel (0) target = $region5
    $region4: #{tpu_custom_call.1} parent=1 // pred_region
      _
    $region5: #{tpu_custom_call.1} parent=1 // pred_fallthru
      _
    // Predicated region
    $region6: #{tpu_custom_call.1} parent=1 // pred_check
      _
    $region7: #{tpu_custom_call.1} parent=1 // pred_check_branch
      %17 = sbr.rel (0) target = $region9
    $region8: #{tpu_custom_call.1} parent=1 // pred_region
      %s18 = ssub.s32 0, 0
      %s19 = smul.u32 8, %s18
      %p20 = scmp.lt.s32.totalorder %s19, 7
      %s21 = scalar_select %p20, %s19, 7
      %s22 = smul.addr %s21, 4
      %s23 = scalar_lea.vmem %s1, %s22
      %s24 = ssub.s32 0, 0
      %s25 = smul.u32 8, %s24
    $region9: #{tpu_custom_call.1} parent=1 // pred_fallthru
      _
    // Predicated region
    $region10: #{tpu_custom_call.1} parent=1 // pred_check
      _
    $region11: #{tpu_custom_call.1} parent=1 // pred_check_branch
      %27 = sbr.rel (0) target = $region13
    $region12: #{tpu_custom_call.1} parent=1 // pred_region
      _
    $region13: #{tpu_custom_call.1} parent=1 // pred_fallthru
      _
    // Predicated region
    $region14: #{tpu_custom_call.1} parent=1 // pred_check
      _
    $region15: #{tpu_custom_call.1} parent=1 // pred_check_branch
      %29 = sbr.rel (0) target = $region17
    $region16: #{tpu_custom_call.1} parent=1 // pred_region
      _
    $region17: #{tpu_custom_call.1} parent=1 // pred_fallthru
      _
    // Predicated region
    $region18: #{tpu_custom_call.1} parent=1 // pred_check
      _
    $region19: #{tpu_custom_call.1} parent=1 // pred_check_branch
      %31 = sbr.rel (0) target = $region21
    $region20: #{tpu_custom_call.1} parent=1 // pred_region
      _
    $region21: #{tpu_custom_call.1} parent=1 // pred_fallthru
      _
    %s32 = ssub.s32 0, 0
    %s33 = smul.u32 8, %s32
    %p34 = scmp.lt.s32.totalorder %s33, 7
    %s35 = scalar_select %p34, %s33, 7
    %s36 = smul.addr %s35, 4
    %s37 = scalar_lea.vmem %s1, %s36
    %s38 = ssub.s32 0, 0
    %s39 = smul.u32 8, %s38
    %p40 = scmp.lt.s32.totalorder %s39, 7
    %s41 = scalar_select %p40, %s39, 7
    %s42 = smul.addr %s41, 4
    %s43 = scalar_lea.vmem %s1, %s42
    %s44 = ssub.s32 0, 0
    %s45 = smul.u32 8, %s44
    %s46 = ssub.s32 0, 0
    %s47 = smul.u32 8, %s46
    %p49 = scmp.eq.s32.totalorder 0, 0
    // Predicated region
    $region22: #{tpu_custom_call.1} parent=1 // pred_check
      %p50 = pneg %p49
    $region23: #{tpu_custom_call.1} parent=1 // pred_check_branch
      %52 = sbr.rel (%p50) target = $region25
    $region24: #{tpu_custom_call.1} parent=1 // pred_region
      %vm53 = vcmask 261120
      %54 = vst.msk [vmem:[#allocation2] sm:$0xff] %vm53, 0.0
      %55 = vst.msk [vmem:[#allocation3] sm:$0xff] %vm53, 0.0
      %56 = vst.msk [vmem:[#allocation4] sm:$0xff] %vm53, 0.0
      %57 = vst.msk [vmem:[#allocation5] sm:$0xff] %vm53, 0.0
    $region25: #{tpu_custom_call.1} parent=1 // pred_fallthru
      _
    %v58 = vld [vmem:[%s4] sm:$0x1]
    %s59 = scalar_lea.vmem %s4, 1
    %v60 = vld [vmem:[%s59] sm:$0x1]
    %v61 = vld [vmem:[%s0] sm:$0xf]
    %v62 = vld [vmem:[%s0 + $0x4] sm:$0xf]
    %v63 = vld [vmem:[%s0 + $0x8] sm:$0xf]
    %v64 = vld [vmem:[%s0 + $0xc] sm:$0xf]
    %v65 = vld [vmem:[%s0 + $0x10] sm:$0xf]
    %v66 = vld [vmem:[%s0 + $0x14] sm:$0xf]
    %v67 = vld [vmem:[%s0 + $0x18] sm:$0xf]
    %v68 = vld [vmem:[%s0 + $0x1c] sm:$0xf]
    %v69 = vld [vmem:[%s2] sm:$0xf]
    %v70 = vld [vmem:[%s2 + $0x4] sm:$0xf]
    %v79 = vunpack.c.l.b16 %v61
    %v80 = vunpack.c.l.b16 %v62
    %v81 = vunpack.c.l.b16 %v63
    %v82 = vunpack.c.l.b16 %v64
    %v83 = vunpack.c.l.b16 %v65
    %v84 = vunpack.c.l.b16 %v66
    %v85 = vunpack.c.l.b16 %v67
    %v86 = vunpack.c.l.b16 %v68
    %v87 = vpack.c.b16 %v80, %v79
    %v88 = vpack.c.b16 %v82, %v81
    %v89 = vpack.c.b16 %v84, %v83
    %v90 = vpack.c.b16 %v86, %v85
    %v93 = vunpack.c.l.b16 %v69
    %v94 = vunpack.c.l.b16 %v70
    %v95 = vpack.c.b16 %v94, %v93
    %vm97 = vcmask 130048
    %v99 = vsel %vm97, %v87, 0
    %v102 = vsel %vm97, %v88, 0
    %v105 = vsel %vm97, %v89, 0
    %v108 = vsel %vm97, %v90, 0
    %110 = vmatprep.subr.bf16.mxu0 0
    %111 = vmatpush1.bf16.msra.mxu0 %v95
    %112 = vmatprep.subr.bf16.mxu0 0
    %113 = vmatpush1.bf16.msra.mxu0 0
    %114 = vmatprep.subr.bf16.mxu0 0
    %115 = vmatpush1.bf16.msra.mxu0 0
    %116 = vmatprep.subr.bf16.mxu0 0
    %117 = vmatpush1.bf16.msra.mxu0 0
    %118 = vmatprep.subr.bf16.mxu0 0
    %119 = vmatpush1.bf16.msra.mxu0 0
    %120 = vmatprep.subr.bf16.mxu0 0
    %121 = vmatpush1.bf16.msra.mxu0 0
    %122 = vmatprep.subr.bf16.mxu0 0
    %123 = vmatpush1.bf16.msra.mxu0 0
    %124 = vmatprep.subr.bf16.mxu0 0
    %125 = vmatpush1.bf16.msra.mxu0 0
    %126 = vmatprep.subr.bf16.mxu0 0
    %127 = vmatpush1.bf16.msra.mxu0 0
    %128 = vmatprep.subr.bf16.mxu0 0
    %129 = vmatpush1.bf16.msra.mxu0 0
    %130 = vmatprep.subr.bf16.mxu0 0
    %131 = vmatpush1.bf16.msra.mxu0 0
    %132 = vmatprep.subr.bf16.mxu0 0
    %133 = vmatpush1.bf16.msra.mxu0 0
    %134 = vmatprep.subr.bf16.mxu0 0
    %135 = vmatpush1.bf16.msra.mxu0 0
    %136 = vmatprep.subr.bf16.mxu0 0
    %137 = vmatpush1.bf16.msra.mxu0 0
    %138 = vmatprep.subr.bf16.mxu0 0
    %139 = vmatpush1.bf16.msra.mxu0 0
    %140 = vmatprep.subr.bf16.mxu0 0
    %141 = vmatpush1.bf16.msra.mxu0 0
    %142 = vmatprep.mubr.bf16.mxu0 0
    %143 = vmatmul.mubr.bf16.gmra.mrb[0].mxu0 %v99
    %v144 = vpop.f32.mrb[0].mxu0
    %v145 = vadd.f32 0.0, %v144
    %v146 = vpop.f32.mrb[0].mxu0
    %v147 = vpop.f32.mrb[0].mxu0
    %v148 = vadd.f32 0.0, %v147
    %v149 = vpop.f32.mrb[0].mxu0
    %150 = vmatprep.mubr.bf16.mxu0 0
    %151 = vmatmul.mubr.bf16.gmra.mrb[0].mxu0 %v102
    %v152 = vpop.f32.mrb[0].mxu0
    %v153 = vadd.f32 0.0, %v152
    %v154 = vpop.f32.mrb[0].mxu0
    %v155 = vpop.f32.mrb[0].mxu0
    %v156 = vadd.f32 0.0, %v155
    %v157 = vpop.f32.mrb[0].mxu0
    %158 = vmatprep.mubr.bf16.mxu0 0
    %159 = vmatmul.mubr.bf16.gmra.mrb[0].mxu0 %v105
    %v160 = vpop.f32.mrb[0].mxu0
    %v161 = vadd.f32 0.0, %v160
    %v162 = vpop.f32.mrb[0].mxu0
    %v163 = vpop.f32.mrb[0].mxu0
    %v164 = vadd.f32 0.0, %v163
    %v165 = vpop.f32.mrb[0].mxu0
    %166 = vmatprep.mubr.bf16.mxu0 0
    %167 = vmatmul.mubr.bf16.gmra.mrb[0].mxu0 %v108
    %v168 = vpop.f32.mrb[0].mxu0
    %v169 = vadd.f32 0.0, %v168
    %v170 = vpop.f32.mrb[0].mxu0
    %v171 = vpop.f32.mrb[0].mxu0
    %v172 = vadd.f32 0.0, %v171
    %v173 = vpop.f32.mrb[0].mxu0
    %174 = vdwg.mxu0
    %v176 = vlaneseq
    %v177 = vshrl.u32 %v176, 7
    %v178 = vsub.s32 0, %v177
    %v179 = vrot.slane %v58, %v178
    %v181 = vadd.f32 %v179, %v145
    %v182 = vadd.f32 %v179, %v148
    %v183 = vadd.f32 %v179, %v153
    %v184 = vadd.f32 %v179, %v156
    %v185 = vadd.f32 %v179, %v161
    %v186 = vadd.f32 %v179, %v164
    %v187 = vadd.f32 %v179, %v169
    %v188 = vadd.f32 %v179, %v172
    %v189 = vld [vmem:[%s43] sm:$0xf]
    %v190 = vld [vmem:[%s43 + $0x4] sm:$0xf]
    %v191 = vld [vmem:[%s43 + $0x8] sm:$0xf]
    %v192 = vld [vmem:[%s43 + $0xc] sm:$0xf]
    %v193 = vld [vmem:[%s43 + $0x10] sm:$0xf]
    %v194 = vld [vmem:[%s43 + $0x14] sm:$0xf]
    %v195 = vld [vmem:[%s43 + $0x18] sm:$0xf]
    %v196 = vld [vmem:[%s43 + $0x1c] sm:$0xf]
    %s197 = scalar_lea.vmem %s2, 8
    %v198 = vld [vmem:[%s197] sm:$0xf]
    %v199 = vld [vmem:[%s197 + $0x4] sm:$0xf]
    %v208 = vunpack.c.l.b16 %v189
    %v209 = vunpack.c.l.b16 %v190
    %v210 = vunpack.c.l.b16 %v191
    %v211 = vunpack.c.l.b16 %v192
    %v212 = vunpack.c.l.b16 %v193
    %v213 = vunpack.c.l.b16 %v194
    %v214 = vunpack.c.l.b16 %v195
    %v215 = vunpack.c.l.b16 %v196
    %v216 = vpack.c.b16 %v209, %v208
    %v217 = vpack.c.b16 %v211, %v210
    %v218 = vpack.c.b16 %v213, %v212
    %v219 = vpack.c.b16 %v215, %v214
    %v222 = vunpack.c.l.b16 %v198
    %v223 = vunpack.c.l.b16 %v199
    %v224 = vpack.c.b16 %v223, %v222
    %v227 = vsel %vm97, %v216, 0
    %v230 = vsel %vm97, %v217, 0
    %v233 = vsel %vm97, %v218, 0
    %v236 = vsel %vm97, %v219, 0
    %238 = vmatprep.subr.bf16.mxu0 0
    %239 = vmatpush1.bf16.msra.mxu0 %v224
    %240 = vmatprep.subr.bf16.mxu0 0
    %241 = vmatpush1.bf16.msra.mxu0 0
    %242 = vmatprep.subr.bf16.mxu0 0
    %243 = vmatpush1.bf16.msra.mxu0 0
    %244 = vmatprep.subr.bf16.mxu0 0
    %245 = vmatpush1.bf16.msra.mxu0 0
    %246 = vmatprep.subr.bf16.mxu0 0
    %247 = vmatpush1.bf16.msra.mxu0 0
    %248 = vmatprep.subr.bf16.mxu0 0
    %249 = vmatpush1.bf16.msra.mxu0 0
    %250 = vmatprep.subr.bf16.mxu0 0
    %251 = vmatpush1.bf16.msra.mxu0 0
    %252 = vmatprep.subr.bf16.mxu0 0
    %253 = vmatpush1.bf16.msra.mxu0 0
    %254 = vmatprep.subr.bf16.mxu0 0
    %255 = vmatpush1.bf16.msra.mxu0 0
    %256 = vmatprep.subr.bf16.mxu0 0
    %257 = vmatpush1.bf16.msra.mxu0 0
    %258 = vmatprep.subr.bf16.mxu0 0
    %259 = vmatpush1.bf16.msra.mxu0 0
    %260 = vmatprep.subr.bf16.mxu0 0
    %261 = vmatpush1.bf16.msra.mxu0 0
    %262 = vmatprep.subr.bf16.mxu0 0
    %263 = vmatpush1.bf16.msra.mxu0 0
    %264 = vmatprep.subr.bf16.mxu0 0
    %265 = vmatpush1.bf16.msra.mxu0 0
    %266 = vmatprep.subr.bf16.mxu0 0
    %267 = vmatpush1.bf16.msra.mxu0 0
    %268 = vmatprep.subr.bf16.mxu0 0
    %269 = vmatpush1.bf16.msra.mxu0 0
    %270 = vmatprep.mubr.bf16.mxu0 0
    %271 = vmatmul.mubr.bf16.gmra.mrb[0].mxu0 %v227
    %v272 = vpop.f32.mrb[0].mxu0
    %v273 = vadd.f32 0.0, %v272
    %v274 = vpop.f32.mrb[0].mxu0
    %v275 = vpop.f32.mrb[0].mxu0
    %v276 = vadd.f32 0.0, %v275
    %v277 = vpop.f32.mrb[0].mxu0
    %278 = vmatprep.mubr.bf16.mxu0 0
    %279 = vmatmul.mubr.bf16.gmra.mrb[0].mxu0 %v230
    %v280 = vpop.f32.mrb[0].mxu0
    %v281 = vadd.f32 0.0, %v280
    %v282 = vpop.f32.mrb[0].mxu0
    %v283 = vpop.f32.mrb[0].mxu0
    %v284 = vadd.f32 0.0, %v283
    %v285 = vpop.f32.mrb[0].mxu0
    %286 = vmatprep.mubr.bf16.mxu0 0
    %287 = vmatmul.mubr.bf16.gmra.mrb[0].mxu0 %v233
    %v288 = vpop.f32.mrb[0].mxu0
    %v289 = vadd.f32 0.0, %v288
    %v290 = vpop.f32.mrb[0].mxu0
    %v291 = vpop.f32.mrb[0].mxu0
    %v292 = vadd.f32 0.0, %v291
    %v293 = vpop.f32.mrb[0].mxu0
    %294 = vmatprep.mubr.bf16.mxu0 0
    %295 = vmatmul.mubr.bf16.gmra.mrb[0].mxu0 %v236
    %v296 = vpop.f32.mrb[0].mxu0
    %v297 = vadd.f32 0.0, %v296
    %v298 = vpop.f32.mrb[0].mxu0
    %v299 = vpop.f32.mrb[0].mxu0
    %v300 = vadd.f32 0.0, %v299
    %v301 = vpop.f32.mrb[0].mxu0
    %302 = vdwg.mxu0
    %v304 = vlaneseq
    %v305 = vshrl.u32 %v304, 7
    %v306 = vsub.s32 0, %v305
    %v307 = vrot.slane %v60, %v306
    %v309 = vadd.f32 %v307, %v273
    %v310 = vadd.f32 %v307, %v276
    %v311 = vadd.f32 %v307, %v281
    %v312 = vadd.f32 %v307, %v284
    %v313 = vadd.f32 %v307, %v289
    %v314 = vadd.f32 %v307, %v292
    %v315 = vadd.f32 %v307, %v297
    %v316 = vadd.f32 %v307, %v300
    %317 = vst [vmem:[#allocation6] sm:$0xff] %v181
    %318 = vst [vmem:[#allocation6 + $0x8] sm:$0xff] %v182
    %319 = vst [vmem:[#allocation6 + $0x10] sm:$0xff] %v183
    %320 = vst [vmem:[#allocation6 + $0x18] sm:$0xff] %v184
    %321 = vst [vmem:[#allocation6 + $0x20] sm:$0xff] %v185
    %322 = vst [vmem:[#allocation6 + $0x28] sm:$0xff] %v186
    %323 = vst [vmem:[#allocation6 + $0x30] sm:$0xff] %v187
    %324 = vst [vmem:[#allocation6 + $0x38] sm:$0xff] %v188
    %325 = vst [vmem:[#allocation7] sm:$0xff] %v309
    %326 = vst [vmem:[#allocation7 + $0x8] sm:$0xff] %v310
    %327 = vst [vmem:[#allocation7 + $0x10] sm:$0xff] %v311
    %328 = vst [vmem:[#allocation7 + $0x18] sm:$0xff] %v312
    %329 = vst [vmem:[#allocation7 + $0x20] sm:$0xff] %v313
    %330 = vst [vmem:[#allocation7 + $0x28] sm:$0xff] %v314
    %331 = vst [vmem:[#allocation7 + $0x30] sm:$0xff] %v315
    %332 = vst [vmem:[#allocation7 + $0x38] sm:$0xff] %v316
    %v333 = vld [vmem:[%s3] sm:$0xf]
    %v334 = vld [vmem:[%s3 + $0x4] sm:$0xf]
    %v335 = vld [vmem:[%s3 + $0x8] sm:$0xf]
    %v336 = vld [vmem:[%s3 + $0xc] sm:$0xf]
    %s337 = scalar_lea.vmem %s3, 16
    %v338 = vld [vmem:[%s337] sm:$0xf]
    %v339 = vld [vmem:[%s337 + $0x4] sm:$0xf]
    %v340 = vld [vmem:[%s337 + $0x8] sm:$0xf]
    %v341 = vld [vmem:[%s337 + $0xc] sm:$0xf]
    %v342 = vld [vmem:[#allocation2] sm:$0xff]
    %v343 = vld [vmem:[#allocation3] sm:$0xff]
    %v344 = vld [vmem:[#allocation4] sm:$0xff]
    %v345 = vld [vmem:[#allocation5] sm:$0xff]
    %v346 = vld [vmem:[#allocation6] sm:$0xff]
    %v347 = vpack.c.bf16 %v342, %v342
    %v352 = vunpack.c.l.b16 %v333
    %v353 = vunpack.c.l.b16 %v334
    %v354 = vunpack.c.l.b16 %v335
    %v355 = vunpack.c.l.b16 %v336
    %v356 = vpack.c.b16 %v353, %v352
    %v357 = vpack.c.b16 %v355, %v354
    %vm360 = vcmask 261120
    %v362 = vsel %vm360, %v347, 0
    %364 = vmatprep.subr.bf16.mxu0 0
    %365 = vmatpush1.bf16.msra.mxu0 %v356
    %366 = vmatprep.subr.bf16.mxu0 0
    %367 = vmatpush1.bf16.msra.mxu0 %v357
    %368 = vmatprep.subr.bf16.mxu0 0
    %369 = vmatpush1.bf16.msra.mxu0 0
    %370 = vmatprep.subr.bf16.mxu0 0
    %371 = vmatpush1.bf16.msra.mxu0 0
    %372 = vmatprep.subr.bf16.mxu0 0
    %373 = vmatpush1.bf16.msra.mxu0 0
    %374 = vmatprep.subr.bf16.mxu0 0
    %375 = vmatpush1.bf16.msra.mxu0 0
    %376 = vmatprep.subr.bf16.mxu0 0
    %377 = vmatpush1.bf16.msra.mxu0 0
    %378 = vmatprep.subr.bf16.mxu0 0
    %379 = vmatpush1.bf16.msra.mxu0 0
    %380 = vmatprep.subr.bf16.mxu0 0
    %381 = vmatpush1.bf16.msra.mxu0 0
    %382 = vmatprep.subr.bf16.mxu0 0
    %383 = vmatpush1.bf16.msra.mxu0 0
    %384 = vmatprep.subr.bf16.mxu0 0
    %385 = vmatpush1.bf16.msra.mxu0 0
    %386 = vmatprep.subr.bf16.mxu0 0
    %387 = vmatpush1.bf16.msra.mxu0 0
    %388 = vmatprep.subr.bf16.mxu0 0
    %389 = vmatpush1.bf16.msra.mxu0 0
    %390 = vmatprep.subr.bf16.mxu0 0
    %391 = vmatpush1.bf16.msra.mxu0 0
    %392 = vmatprep.subr.bf16.mxu0 0
    %393 = vmatpush1.bf16.msra.mxu0 0
    %394 = vmatprep.subr.bf16.mxu0 0
    %395 = vmatpush1.bf16.msra.mxu0 0
    %396 = vmatprep.mubr.bf16.mxu0 0
    %397 = vmatmul.mubr.bf16.gmra.mrb[0].mxu0 %v362
    %v398 = vpop.f32.mrb[0].mxu0
    %v399 = vadd.f32 0.0, %v398
    %v400 = vpop.f32.mrb[0].mxu0
    %v401 = vpop.f32.mrb[0].mxu0
    %v402 = vpop.f32.mrb[0].mxu0
    %403 = vdwg.mxu0
    %v404 = vadd.f32 %v346, %v399
    %s405 = scalar_lea.vmem [#allocation7], 56
    %v406 = vld [vmem:[%s405] sm:$0xff]
    %v407 = vpack.c.bf16 %v344, %v344
    %v412 = vunpack.c.l.b16 %v338
    %v413 = vunpack.c.l.b16 %v339
    %v414 = vunpack.c.l.b16 %v340
    %v415 = vunpack.c.l.b16 %v341
    %v416 = vpack.c.b16 %v413, %v412
    %v417 = vpack.c.b16 %v415, %v414
    %v421 = vsel %vm360, %v407, 0
    %423 = vmatprep.subr.bf16.mxu0 0
    %424 = vmatpush1.bf16.msra.mxu0 %v416
    %425 = vmatprep.subr.bf16.mxu0 0
    %426 = vmatpush1.bf16.msra.mxu0 %v417
    %427 = vmatprep.subr.bf16.mxu0 0
    %428 = vmatpush1.bf16.msra.mxu0 0
    %429 = vmatprep.subr.bf16.mxu0 0
    %430 = vmatpush1.bf16.msra.mxu0 0
    %431 = vmatprep.subr.bf16.mxu0 0
    %432 = vmatpush1.bf16.msra.mxu0 0
    %433 = vmatprep.subr.bf16.mxu0 0
    %434 = vmatpush1.bf16.msra.mxu0 0
    %435 = vmatprep.subr.bf16.mxu0 0
    %436 = vmatpush1.bf16.msra.mxu0 0
    %437 = vmatprep.subr.bf16.mxu0 0
    %438 = vmatpush1.bf16.msra.mxu0 0
    %439 = vmatprep.subr.bf16.mxu0 0
    %440 = vmatpush1.bf16.msra.mxu0 0
    %441 = vmatprep.subr.bf16.mxu0 0
    %442 = vmatpush1.bf16.msra.mxu0 0
    %443 = vmatprep.subr.bf16.mxu0 0
    %444 = vmatpush1.bf16.msra.mxu0 0
    %445 = vmatprep.subr.bf16.mxu0 0
    %446 = vmatpush1.bf16.msra.mxu0 0
    %447 = vmatprep.subr.bf16.mxu0 0
    %448 = vmatpush1.bf16.msra.mxu0 0
    %449 = vmatprep.subr.bf16.mxu0 0
    %450 = vmatpush1.bf16.msra.mxu0 0
    %451 = vmatprep.subr.bf16.mxu0 0
    %452 = vmatpush1.bf16.msra.mxu0 0
    %453 = vmatprep.subr.bf16.mxu0 0
    %454 = vmatpush1.bf16.msra.mxu0 0
    %455 = vmatprep.mubr.bf16.mxu0 0
    %456 = vmatmul.mubr.bf16.gmra.mrb[0].mxu0 %v421
    %v457 = vpop.f32.mrb[0].mxu0
    %v458 = vadd.f32 0.0, %v457
    %v459 = vpop.f32.mrb[0].mxu0
    %v460 = vpop.f32.mrb[0].mxu0
    %v461 = vpop.f32.mrb[0].mxu0
    %462 = vdwg.mxu0
    %v463 = vadd.f32 %v406, %v458
    %v464 = vxor.u32 %v404, 2147483648
    %v465 = vmul.f32 %v464, 1.442695
    %v466 = vpow.pop %v465
    %v467 = vadd.f32 %v466, 1.0
    %v468 = vrcp.pop %v467
    %v469 = vmul.f32 1.0, %v468
    %v470 = vtanh.pop %v404
    %472 = vrot.lane.b32.xlu0 %v343, 32
    %v473 = vpop.permute.xlu0 %472
    %v475 = vmul.f32 %v469, %v473
    %477 = vrot.lane.b32.xlu0 %v470, 64
    %v478 = vpop.permute.xlu0 %477
    %v480 = vmul.f32 %v469, %v478
    %482 = vrot.lane.b32.xlu0 %v480, 32
    %v483 = vpop.permute.xlu0 %482
    %v485 = vadd.f32 %v475, %v483
    %v486 = vtanh.pop %v485
    %488 = vrot.lane.b32.xlu0 %v486, 64
    %v489 = vpop.permute.xlu0 %488
    %v491 = vmul.f32 %v469, %v489
    %v492 = vxor.u32 %v463, 2147483648
    %v493 = vmul.f32 %v492, 1.442695
    %v494 = vpow.pop %v493
    %v495 = vadd.f32 %v494, 1.0
    %v496 = vrcp.pop %v495
    %v497 = vmul.f32 1.0, %v496
    %v498 = vtanh.pop %v463
    %500 = vrot.lane.b32.xlu0 %v345, 32
    %v501 = vpop.permute.xlu0 %500
    %v503 = vmul.f32 %v497, %v501
    %505 = vrot.lane.b32.xlu0 %v498, 64
    %v506 = vpop.permute.xlu0 %505
    %v508 = vmul.f32 %v497, %v506
    %510 = vrot.lane.b32.xlu0 %v508, 32
    %v511 = vpop.permute.xlu0 %510
    %v513 = vadd.f32 %v503, %v511
    %v514 = vtanh.pop %v513
    %516 = vrot.lane.b32.xlu0 %v514, 64
    %v517 = vpop.permute.xlu0 %516
    %v519 = vmul.f32 %v497, %v517
    %v520 = vpack.c.bf16 %v491, %v491
    %v522 = vunpack.c.l.b16 %v520
    %v523 = vpack.c.b16 %v522, %v522
    %524 = vrot.lane.b32.xlu0 %v523, 32
    %v525 = vpop.permute.xlu0 %524
    %vm527 = vcmask 257024
    %528 = vst.msk [vmem:[#allocation8] sm:$0xf] %vm527, %v525
    %v529 = vpack.c.bf16 %v519, %v519
    %v531 = vunpack.c.l.b16 %v529
    %v532 = vpack.c.b16 %v531, %v531
    %533 = vrot.lane.b32.xlu0 %v532, 32
    %v534 = vpop.permute.xlu0 %533
    %s536 = scalar_lea.vmem [#allocation10], 28
    %537 = vst.msk [vmem:[%s536] sm:$0xf] %vm527, %v534
    %s538 = scalar_lea.vmem [#allocation6], 8
    %v539 = vld [vmem:[%s538] sm:$0xff]
    %540 = vrot.lane.b32.xlu0 %v520, 32
    %v541 = vpop.permute.xlu0 %540
    %v543 = vsel %vm360, %v541, 0
    %545 = vmatprep.subr.bf16.mxu0 0
    %546 = vmatpush1.bf16.msra.mxu0 %v356
    %547 = vmatprep.subr.bf16.mxu0 0
    %548 = vmatpush1.bf16.msra.mxu0 %v357
    %549 = vmatprep.subr.bf16.mxu0 0
    %550 = vmatpush1.bf16.msra.mxu0 0
    %551 = vmatprep.subr.bf16.mxu0 0
    %552 = vmatpush1.bf16.msra.mxu0 0
    %553 = vmatprep.subr.bf16.mxu0 0
    %554 = vmatpush1.bf16.msra.mxu0 0
    %555 = vmatprep.subr.bf16.mxu0 0
    %556 = vmatpush1.bf16.msra.mxu0 0
    %557 = vmatprep.subr.bf16.mxu0 0
    %558 = vmatpush1.bf16.msra.mxu0 0
    %559 = vmatprep.subr.bf16.mxu0 0
    %560 = vmatpush1.bf16.msra.mxu0 0
    %561 = vmatprep.subr.bf16.mxu0 0
    %562 = vmatpush1.bf16.msra.mxu0 0
    %563 = vmatprep.subr.bf16.mxu0 0
    %564 = vmatpush1.bf16.msra.mxu0 0
    %565 = vmatprep.subr.bf16.mxu0 0
    %566 = vmatpush1.bf16.msra.mxu0 0
    %567 = vmatprep.subr.bf16.mxu0 0
    %568 = vmatpush1.bf16.msra.mxu0 0
    %569 = vmatprep.subr.bf16.mxu0 0
    %570 = vmatpush1.bf16.msra.mxu0 0
    %571 = vmatprep.subr.bf16.mxu0 0
    %572 = vmatpush1.bf16.msra.mxu0 0
    %573 = vmatprep.subr.bf16.mxu0 0
    %574 = vmatpush1.bf16.msra.mxu0 0
    %575 = vmatprep.subr.bf16.mxu0 0
    %576 = vmatpush1.bf16.msra.mxu0 0
    %577 = vmatprep.mubr.bf16.mxu0 0
    %578 = vmatmul.mubr.bf16.gmra.mrb[0].mxu0 %v543
    %v579 = vpop.f32.mrb[0].mxu0
    %v580 = vadd.f32 0.0, %v579
    %v581 = vpop.f32.mrb[0].mxu0
    %v582 = vpop.f32.mrb[0].mxu0
    %v583 = vpop.f32.mrb[0].mxu0
    %584 = vdwg.mxu0
    %v585 = vadd.f32 %v539, %v580
    %s586 = scalar_lea.vmem [#allocation7], 48
    %v587 = vld [vmem:[%s586] sm:$0xff]
    %588 = vrot.lane.b32.xlu0 %v529, 32
    %v589 = vpop.permute.xlu0 %588
    %v591 = vsel %vm360, %v589, 0
    %593 = vmatprep.subr.bf16.mxu0 0
    %594 = vmatpush1.bf16.msra.mxu0 %v416
    %595 = vmatprep.subr.bf16.mxu0 0
    %596 = vmatpush1.bf16.msra.mxu0 %v417
    %597 = vmatprep.subr.bf16.mxu0 0
    %598 = vmatpush1.bf16.msra.mxu0 0
    %599 = vmatprep.subr.bf16.mxu0 0
    %600 = vmatpush1.bf16.msra.mxu0 0
    %601 = vmatprep.subr.bf16.mxu0 0
    %602 = vmatpush1.bf16.msra.mxu0 0
    %603 = vmatprep.subr.bf16.mxu0 0
    %604 = vmatpush1.bf16.msra.mxu0 0
    %605 = vmatprep.subr.bf16.mxu0 0
    %606 = vmatpush1.bf16.msra.mxu0 0
    %607 = vmatprep.subr.bf16.mxu0 0
    %608 = vmatpush1.bf16.msra.mxu0 0
    %609 = vmatprep.subr.bf16.mxu0 0
    %610 = vmatpush1.bf16.msra.mxu0 0
    %611 = vmatprep.subr.bf16.mxu0 0
    %612 = vmatpush1.bf16.msra.mxu0 0
    %613 = vmatprep.subr.bf16.mxu0 0
    %614 = vmatpush1.bf16.msra.mxu0 0
    %615 = vmatprep.subr.bf16.mxu0 0
    %616 = vmatpush1.bf16.msra.mxu0 0
    %617 = vmatprep.subr.bf16.mxu0 0
    %618 = vmatpush1.bf16.msra.mxu0 0
    %619 = vmatprep.subr.bf16.mxu0 0
    %620 = vmatpush1.bf16.msra.mxu0 0
    %621 = vmatprep.subr.bf16.mxu0 0
    %622 = vmatpush1.bf16.msra.mxu0 0
    %623 = vmatprep.subr.bf16.mxu0 0
    %624 = vmatpush1.bf16.msra.mxu0 0
    %625 = vmatprep.mubr.bf16.mxu0 0
    %626 = vmatmul.mubr.bf16.gmra.mrb[0].mxu0 %v591
    %v627 = vpop.f32.mrb[0].mxu0
    %v628 = vadd.f32 0.0, %v627
    %v629 = vpop.f32.mrb[0].mxu0
    %v630 = vpop.f32.mrb[0].mxu0
    %v631 = vpop.f32.mrb[0].mxu0
    %632 = vdwg.mxu0
    %v633 = vadd.f32 %v587, %v628
    %v634 = vxor.u32 %v585, 2147483648
    %v635 = vmul.f32 %v634, 1.442695
    %v636 = vpow.pop %v635
    %v637 = vadd.f32 %v636, 1.0
    %v638 = vrcp.pop %v637
    %v639 = vmul.f32 1.0, %v638
    %v640 = vtanh.pop %v585
    %v641 = vmul.f32 %v639, %v485
    %643 = vrot.lane.b32.xlu0 %v640, 64
    %v644 = vpop.permute.xlu0 %643
    %v646 = vmul.f32 %v639, %v644
    %648 = vrot.lane.b32.xlu0 %v646, 32
    %v649 = vpop.permute.xlu0 %648
    %v651 = vadd.f32 %v641, %v649
    %v652 = vtanh.pop %v651
    %654 = vrot.lane.b32.xlu0 %v652, 64
    %v655 = vpop.permute.xlu0 %654
    %v657 = vmul.f32 %v639, %v655
    %v658 = vxor.u32 %v633, 2147483648
    %v659 = vmul.f32 %v658, 1.442695
    %v660 = vpow.pop %v659
    %v661 = vadd.f32 %v660, 1.0
    %v662 = vrcp.pop %v661
    %v663 = vmul.f32 1.0, %v662
    %v664 = vtanh.pop %v633
    %v665 = vmul.f32 %v663, %v513
    %667 = vrot.lane.b32.xlu0 %v664, 64
    %v668 = vpop.permute.xlu0 %667
    %v670 = vmul.f32 %v663, %v668
    %672 = vrot.lane.b32.xlu0 %v670, 32
    %v673 = vpop.permute.xlu0 %672
    %v675 = vadd.f32 %v665, %v673
    %v676 = vtanh.pop %v675
    %678 = vrot.lane.b32.xlu0 %v676, 64
    %v679 = vpop.permute.xlu0 %678
    %v681 = vmul.f32 %v663, %v679
    %v682 = vpack.c.bf16 %v657, %v657
    %v684 = vunpack.c.l.b16 %v682
    %v685 = vpack.c.b16 %v684, %v684
    %686 = vrot.lane.b32.xlu0 %v685, 32
    %v687 = vpop.permute.xlu0 %686
    %s689 = scalar_lea.vmem [#allocation8], 4
    %690 = vst.msk [vmem:[%s689] sm:$0xf] %vm527, %v687
    %v691 = vpack.c.bf16 %v681, %v681
    %v693 = vunpack.c.l.b16 %v691
    %v694 = vpack.c.b16 %v693, %v693
    %695 = vrot.lane.b32.xlu0 %v694, 32
    %v696 = vpop.permute.xlu0 %695
    %s698 = scalar_lea.vmem [#allocation10], 24
    %699 = vst.msk [vmem:[%s698] sm:$0xf] %vm527, %v696
    %s700 = scalar_lea.vmem [#allocation6], 16
    %v701 = vld [vmem:[%s700] sm:$0xff]
    %702 = vrot.lane.b32.xlu0 %v682, 32
    %v703 = vpop.permute.xlu0 %702
    %v705 = vsel %vm360, %v703, 0
    %707 = vmatprep.subr.bf16.mxu0 0
    %708 = vmatpush1.bf16.msra.mxu0 %v356
    %709 = vmatprep.subr.bf16.mxu0 0
    %710 = vmatpush1.bf16.msra.mxu0 %v357
    %711 = vmatprep.subr.bf16.mxu0 0
    %712 = vmatpush1.bf16.msra.mxu0 0
    %713 = vmatprep.subr.bf16.mxu0 0
    %714 = vmatpush1.bf16.msra.mxu0 0
    %715 = vmatprep.subr.bf16.mxu0 0
    %716 = vmatpush1.bf16.msra.mxu0 0
    %717 = vmatprep.subr.bf16.mxu0 0
    %718 = vmatpush1.bf16.msra.mxu0 0
    %719 = vmatprep.subr.bf16.mxu0 0
    %720 = vmatpush1.bf16.msra.mxu0 0
    %721 = vmatprep.subr.bf16.mxu0 0
    %722 = vmatpush1.bf16.msra.mxu0 0
    %723 = vmatprep.subr.bf16.mxu0 0
    %724 = vmatpush1.bf16.msra.mxu0 0
    %725 = vmatprep.subr.bf16.mxu0 0
    %726 = vmatpush1.bf16.msra.mxu0 0
    %727 = vmatprep.subr.bf16.mxu0 0
    %728 = vmatpush1.bf16.msra.mxu0 0
    %729 = vmatprep.subr.bf16.mxu0 0
    %730 = vmatpush1.bf16.msra.mxu0 0
    %731 = vmatprep.subr.bf16.mxu0 0
    %732 = vmatpush1.bf16.msra.mxu0 0
    %733 = vmatprep.subr.bf16.mxu0 0
    %734 = vmatpush1.bf16.msra.mxu0 0
    %735 = vmatprep.subr.bf16.mxu0 0
    %736 = vmatpush1.bf16.msra.mxu0 0
    %737 = vmatprep.subr.bf16.mxu0 0
    %738 = vmatpush1.bf16.msra.mxu0 0
    %739 = vmatprep.mubr.bf16.mxu0 0
    %740 = vmatmul.mubr.bf16.gmra.mrb[0].mxu0 %v705
    %v741 = vpop.f32.mrb[0].mxu0
    %v742 = vadd.f32 0.0, %v741
    %v743 = vpop.f32.mrb[0].mxu0
    %v744 = vpop.f32.mrb[0].mxu0
    %v745 = vpop.f32.mrb[0].mxu0
    %746 = vdwg.mxu0
    %v747 = vadd.f32 %v701, %v742
    %s748 = scalar_lea.vmem [#allocation7], 40
    %v749 = vld [vmem:[%s748] sm:$0xff]
    %750 = vrot.lane.b32.xlu0 %v691, 32
    %v751 = vpop.permute.xlu0 %750
    %v753 = vsel %vm360, %v751, 0
    %755 = vmatprep.subr.bf16.mxu0 0
    %756 = vmatpush1.bf16.msra.mxu0 %v416
    %757 = vmatprep.subr.bf16.mxu0 0
    %758 = vmatpush1.bf16.msra.mxu0 %v417
    %759 = vmatprep.subr.bf16.mxu0 0
    %760 = vmatpush1.bf16.msra.mxu0 0
    %761 = vmatprep.subr.bf16.mxu0 0
    %762 = vmatpush1.bf16.msra.mxu0 0
    %763 = vmatprep.subr.bf16.mxu0 0
    %764 = vmatpush1.bf16.msra.mxu0 0
    %765 = vmatprep.subr.bf16.mxu0 0
    %766 = vmatpush1.bf16.msra.mxu0 0
    %767 = vmatprep.subr.bf16.mxu0 0
    %768 = vmatpush1.bf16.msra.mxu0 0
    %769 = vmatprep.subr.bf16.mxu0 0
    %770 = vmatpush1.bf16.msra.mxu0 0
    %771 = vmatprep.subr.bf16.mxu0 0
    %772 = vmatpush1.bf16.msra.mxu0 0
    %773 = vmatprep.subr.bf16.mxu0 0
    %774 = vmatpush1.bf16.msra.mxu0 0
    %775 = vmatprep.subr.bf16.mxu0 0
    %776 = vmatpush1.bf16.msra.mxu0 0
    %777 = vmatprep.subr.bf16.mxu0 0
    %778 = vmatpush1.bf16.msra.mxu0 0
    %779 = vmatprep.subr.bf16.mxu0 0
    %780 = vmatpush1.bf16.msra.mxu0 0
    %781 = vmatprep.subr.bf16.mxu0 0
    %782 = vmatpush1.bf16.msra.mxu0 0
    %783 = vmatprep.subr.bf16.mxu0 0
    %784 = vmatpush1.bf16.msra.mxu0 0
    %785 = vmatprep.subr.bf16.mxu0 0
    %786 = vmatpush1.bf16.msra.mxu0 0
    %787 = vmatprep.mubr.bf16.mxu0 0
    %788 = vmatmul.mubr.bf16.gmra.mrb[0].mxu0 %v753
    %v789 = vpop.f32.mrb[0].mxu0
    %v790 = vadd.f32 0.0, %v789
    %v791 = vpop.f32.mrb[0].mxu0
    %v792 = vpop.f32.mrb[0].mxu0
    %v793 = vpop.f32.mrb[0].mxu0
    %794 = vdwg.mxu0
    %v795 = vadd.f32 %v749, %v790
    %v796 = vxor.u32 %v747, 2147483648
    %v797 = vmul.f32 %v796, 1.442695
    %v798 = vpow.pop %v797
    %v799 = vadd.f32 %v798, 1.0
    %v800 = vrcp.pop %v799
    %v801 = vmul.f32 1.0, %v800
    %v802 = vtanh.pop %v747
    %v803 = vmul.f32 %v801, %v651
    %805 = vrot.lane.b32.xlu0 %v802, 64
    %v806 = vpop.permute.xlu0 %805
    %v808 = vmul.f32 %v801, %v806
    %810 = vrot.lane.b32.xlu0 %v808, 32
    %v811 = vpop.permute.xlu0 %810
    %v813 = vadd.f32 %v803, %v811
    %v814 = vtanh.pop %v813
    %816 = vrot.lane.b32.xlu0 %v814, 64
    %v817 = vpop.permute.xlu0 %816
    %v819 = vmul.f32 %v801, %v817
    %v820 = vxor.u32 %v795, 2147483648
    %v821 = vmul.f32 %v820, 1.442695
    %v822 = vpow.pop %v821
    %v823 = vadd.f32 %v822, 1.0
    %v824 = vrcp.pop %v823
    %v825 = vmul.f32 1.0, %v824
    %v826 = vtanh.pop %v795
    %v827 = vmul.f32 %v825, %v675
    %829 = vrot.lane.b32.xlu0 %v826, 64
    %v830 = vpop.permute.xlu0 %829
    %v832 = vmul.f32 %v825, %v830
    %834 = vrot.lane.b32.xlu0 %v832, 32
    %v835 = vpop.permute.xlu0 %834
    %v837 = vadd.f32 %v827, %v835
    %v838 = vtanh.pop %v837
    %840 = vrot.lane.b32.xlu0 %v838, 64
    %v841 = vpop.permute.xlu0 %840
    %v843 = vmul.f32 %v825, %v841
    %v844 = vpack.c.bf16 %v819, %v819
    %v846 = vunpack.c.l.b16 %v844
    %v847 = vpack.c.b16 %v846, %v846
    %848 = vrot.lane.b32.xlu0 %v847, 32
    %v849 = vpop.permute.xlu0 %848
    %s851 = scalar_lea.vmem [#allocation8], 8
    %852 = vst.msk [vmem:[%s851] sm:$0xf] %vm527, %v849
    %v853 = vpack.c.bf16 %v843, %v843
    %v855 = vunpack.c.l.b16 %v853
    %v856 = vpack.c.b16 %v855, %v855
    %857 = vrot.lane.b32.xlu0 %v856, 32
    %v858 = vpop.permute.xlu0 %857
    %s860 = scalar_lea.vmem [#allocation10], 20
    %861 = vst.msk [vmem:[%s860] sm:$0xf] %vm527, %v858
    %s862 = scalar_lea.vmem [#allocation6], 24
    %v863 = vld [vmem:[%s862] sm:$0xff]
    %864 = vrot.lane.b32.xlu0 %v844, 32
    %v865 = vpop.permute.xlu0 %864
    %v867 = vsel %vm360, %v865, 0
    %869 = vmatprep.subr.bf16.mxu0 0
    %870 = vmatpush1.bf16.msra.mxu0 %v356
    %871 = vmatprep.subr.bf16.mxu0 0
    %872 = vmatpush1.bf16.msra.mxu0 %v357
    %873 = vmatprep.subr.bf16.mxu0 0
    %874 = vmatpush1.bf16.msra.mxu0 0
    %875 = vmatprep.subr.bf16.mxu0 0
    %876 = vmatpush1.bf16.msra.mxu0 0
    %877 = vmatprep.subr.bf16.mxu0 0
    %878 = vmatpush1.bf16.msra.mxu0 0
    %879 = vmatprep.subr.bf16.mxu0 0
    %880 = vmatpush1.bf16.msra.mxu0 0
    %881 = vmatprep.subr.bf16.mxu0 0
    %882 = vmatpush1.bf16.msra.mxu0 0
    %883 = vmatprep.subr.bf16.mxu0 0
    %884 = vmatpush1.bf16.msra.mxu0 0
    %885 = vmatprep.subr.bf16.mxu0 0
    %886 = vmatpush1.bf16.msra.mxu0 0
    %887 = vmatprep.subr.bf16.mxu0 0
    %888 = vmatpush1.bf16.msra.mxu0 0
    %889 = vmatprep.subr.bf16.mxu0 0
    %890 = vmatpush1.bf16.msra.mxu0 0
    %891 = vmatprep.subr.bf16.mxu0 0
    %892 = vmatpush1.bf16.msra.mxu0 0
    %893 = vmatprep.subr.bf16.mxu0 0
    %894 = vmatpush1.bf16.msra.mxu0 0
    %895 = vmatprep.subr.bf16.mxu0 0
    %896 = vmatpush1.bf16.msra.mxu0 0
    %897 = vmatprep.subr.bf16.mxu0 0
    %898 = vmatpush1.bf16.msra.mxu0 0
    %899 = vmatprep.subr.bf16.mxu0 0
    %900 = vmatpush1.bf16.msra.mxu0 0
    %901 = vmatprep.mubr.bf16.mxu0 0
    %902 = vmatmul.mubr.bf16.gmra.mrb[0].mxu0 %v867
    %v903 = vpop.f32.mrb[0].mxu0
    %v904 = vadd.f32 0.0, %v903
    %v905 = vpop.f32.mrb[0].mxu0
    %v906 = vpop.f32.mrb[0].mxu0
    %v907 = vpop.f32.mrb[0].mxu0
    %908 = vdwg.mxu0
    %v909 = vadd.f32 %v863, %v904
    %s910 = scalar_lea.vmem [#allocation7], 32
    %v911 = vld [vmem:[%s910] sm:$0xff]
    %912 = vrot.lane.b32.xlu0 %v853, 32
    %v913 = vpop.permute.xlu0 %912
    %v915 = vsel %vm360, %v913, 0
    %917 = vmatprep.subr.bf16.mxu0 0
    %918 = vmatpush1.bf16.msra.mxu0 %v416
    %919 = vmatprep.subr.bf16.mxu0 0
    %920 = vmatpush1.bf16.msra.mxu0 %v417
    %921 = vmatprep.subr.bf16.mxu0 0
    %922 = vmatpush1.bf16.msra.mxu0 0
    %923 = vmatprep.subr.bf16.mxu0 0
    %924 = vmatpush1.bf16.msra.mxu0 0
    %925 = vmatprep.subr.bf16.mxu0 0
    %926 = vmatpush1.bf16.msra.mxu0 0
    %927 = vmatprep.subr.bf16.mxu0 0
    %928 = vmatpush1.bf16.msra.mxu0 0
    %929 = vmatprep.subr.bf16.mxu0 0
    %930 = vmatpush1.bf16.msra.mxu0 0
    %931 = vmatprep.subr.bf16.mxu0 0
    %932 = vmatpush1.bf16.msra.mxu0 0
    %933 = vmatprep.subr.bf16.mxu0 0
    %934 = vmatpush1.bf16.msra.mxu0 0
    %935 = vmatprep.subr.bf16.mxu0 0
    %936 = vmatpush1.bf16.msra.mxu0 0
    %937 = vmatprep.subr.bf16.mxu0 0
    %938 = vmatpush1.bf16.msra.mxu0 0
    %939 = vmatprep.subr.bf16.mxu0 0
    %940 = vmatpush1.bf16.msra.mxu0 0
    %941 = vmatprep.subr.bf16.mxu0 0
    %942 = vmatpush1.bf16.msra.mxu0 0
    %943 = vmatprep.subr.bf16.mxu0 0
    %944 = vmatpush1.bf16.msra.mxu0 0
    %945 = vmatprep.subr.bf16.mxu0 0
    %946 = vmatpush1.bf16.msra.mxu0 0
    %947 = vmatprep.subr.bf16.mxu0 0
    %948 = vmatpush1.bf16.msra.mxu0 0
    %949 = vmatprep.mubr.bf16.mxu0 0
    %950 = vmatmul.mubr.bf16.gmra.mrb[0].mxu0 %v915
    %v951 = vpop.f32.mrb[0].mxu0
    %v952 = vadd.f32 0.0, %v951
    %v953 = vpop.f32.mrb[0].mxu0
    %v954 = vpop.f32.mrb[0].mxu0
    %v955 = vpop.f32.mrb[0].mxu0
    %956 = vdwg.mxu0
    %v957 = vadd.f32 %v911, %v952
    %v958 = vxor.u32 %v909, 2147483648
    %v959 = vmul.f32 %v958, 1.442695
    %v960 = vpow.pop %v959
    %v961 = vadd.f32 %v960, 1.0
    %v962 = vrcp.pop %v961
    %v963 = vmul.f32 1.0, %v962
    %v964 = vtanh.pop %v909
    %v965 = vmul.f32 %v963, %v813
    %967 = vrot.lane.b32.xlu0 %v964, 64
    %v968 = vpop.permute.xlu0 %967
    %v970 = vmul.f32 %v963, %v968
    %972 = vrot.lane.b32.xlu0 %v970, 32
    %v973 = vpop.permute.xlu0 %972
    %v975 = vadd.f32 %v965, %v973
    %v976 = vtanh.pop %v975
    %978 = vrot.lane.b32.xlu0 %v976, 64
    %v979 = vpop.permute.xlu0 %978
    %v981 = vmul.f32 %v963, %v979
    %v982 = vxor.u32 %v957, 2147483648
    %v983 = vmul.f32 %v982, 1.442695
    %v984 = vpow.pop %v983
    %v985 = vadd.f32 %v984, 1.0
    %v986 = vrcp.pop %v985
    %v987 = vmul.f32 1.0, %v986
    %v988 = vtanh.pop %v957
    %v989 = vmul.f32 %v987, %v837
    %991 = vrot.lane.b32.xlu0 %v988, 64
    %v992 = vpop.permute.xlu0 %991
    %v994 = vmul.f32 %v987, %v992
    %996 = vrot.lane.b32.xlu0 %v994, 32
    %v997 = vpop.permute.xlu0 %996
    %v999 = vadd.f32 %v989, %v997
    %v1000 = vtanh.pop %v999
    %1002 = vrot.lane.b32.xlu0 %v1000, 64
    %v1003 = vpop.permute.xlu0 %1002
    %v1005 = vmul.f32 %v987, %v1003
    %v1006 = vpack.c.bf16 %v981, %v981
    %v1008 = vunpack.c.l.b16 %v1006
    %v1009 = vpack.c.b16 %v1008, %v1008
    %1010 = vrot.lane.b32.xlu0 %v1009, 32
    %v1011 = vpop.permute.xlu0 %1010
    %s1013 = scalar_lea.vmem [#allocation8], 12
    %1014 = vst.msk [vmem:[%s1013] sm:$0xf] %vm527, %v1011
    %v1015 = vpack.c.bf16 %v1005, %v1005
    %v1017 = vunpack.c.l.b16 %v1015
    %v1018 = vpack.c.b16 %v1017, %v1017
    %1019 = vrot.lane.b32.xlu0 %v1018, 32
    %v1020 = vpop.permute.xlu0 %1019
    %s1022 = scalar_lea.vmem [#allocation10], 16
    %1023 = vst.msk [vmem:[%s1022] sm:$0xf] %vm527, %v1020
    %s1024 = scalar_lea.vmem [#allocation6], 32
    %v1025 = vld [vmem:[%s1024] sm:$0xff]
    %1026 = vrot.lane.b32.xlu0 %v1006, 32
    %v1027 = vpop.permute.xlu0 %1026
    %v1029 = vsel %vm360, %v1027, 0
    %1031 = vmatprep.subr.bf16.mxu0 0
    %1032 = vmatpush1.bf16.msra.mxu0 %v356
    %1033 = vmatprep.subr.bf16.mxu0 0
    %1034 = vmatpush1.bf16.msra.mxu0 %v357
    %1035 = vmatprep.subr.bf16.mxu0 0
    %1036 = vmatpush1.bf16.msra.mxu0 0
    %1037 = vmatprep.subr.bf16.mxu0 0
    %1038 = vmatpush1.bf16.msra.mxu0 0
    %1039 = vmatprep.subr.bf16.mxu0 0
    %1040 = vmatpush1.bf16.msra.mxu0 0
    %1041 = vmatprep.subr.bf16.mxu0 0
    %1042 = vmatpush1.bf16.msra.mxu0 0
    %1043 = vmatprep.subr.bf16.mxu0 0
    %1044 = vmatpush1.bf16.msra.mxu0 0
    %1045 = vmatprep.subr.bf16.mxu0 0
    %1046 = vmatpush1.bf16.msra.mxu0 0
    %1047 = vmatprep.subr.bf16.mxu0 0
    %1048 = vmatpush1.bf16.msra.mxu0 0
    %1049 = vmatprep.subr.bf16.mxu0 0
    %1050 = vmatpush1.bf16.msra.mxu0 0
    %1051 = vmatprep.subr.bf16.mxu0 0
    %1052 = vmatpush1.bf16.msra.mxu0 0
    %1053 = vmatprep.subr.bf16.mxu0 0
    %1054 = vmatpush1.bf16.msra.mxu0 0
    %1055 = vmatprep.subr.bf16.mxu0 0
    %1056 = vmatpush1.bf16.msra.mxu0 0
    %1057 = vmatprep.subr.bf16.mxu0 0
    %1058 = vmatpush1.bf16.msra.mxu0 0
    %1059 = vmatprep.subr.bf16.mxu0 0
    %1060 = vmatpush1.bf16.msra.mxu0 0
    %1061 = vmatprep.subr.bf16.mxu0 0
    %1062 = vmatpush1.bf16.msra.mxu0 0
    %1063 = vmatprep.mubr.bf16.mxu0 0
    %1064 = vmatmul.mubr.bf16.gmra.mrb[0].mxu0 %v1029
    %v1065 = vpop.f32.mrb[0].mxu0
    %v1066 = vadd.f32 0.0, %v1065
    %v1067 = vpop.f32.mrb[0].mxu0
    %v1068 = vpop.f32.mrb[0].mxu0
    %v1069 = vpop.f32.mrb[0].mxu0
    %1070 = vdwg.mxu0
    %v1071 = vadd.f32 %v1025, %v1066
    %s1072 = scalar_lea.vmem [#allocation7], 24
    %v1073 = vld [vmem:[%s1072] sm:$0xff]
    %1074 = vrot.lane.b32.xlu0 %v1015, 32
    %v1075 = vpop.permute.xlu0 %1074
    %v1077 = vsel %vm360, %v1075, 0
    %1079 = vmatprep.subr.bf16.mxu0 0
    %1080 = vmatpush1.bf16.msra.mxu0 %v416
    %1081 = vmatprep.subr.bf16.mxu0 0
    %1082 = vmatpush1.bf16.msra.mxu0 %v417
    %1083 = vmatprep.subr.bf16.mxu0 0
    %1084 = vmatpush1.bf16.msra.mxu0 0
    %1085 = vmatprep.subr.bf16.mxu0 0
    %1086 = vmatpush1.bf16.msra.mxu0 0
    %1087 = vmatprep.subr.bf16.mxu0 0
    %1088 = vmatpush1.bf16.msra.mxu0 0
    %1089 = vmatprep.subr.bf16.mxu0 0
    %1090 = vmatpush1.bf16.msra.mxu0 0
    %1091 = vmatprep.subr.bf16.mxu0 0
    %1092 = vmatpush1.bf16.msra.mxu0 0
    %1093 = vmatprep.subr.bf16.mxu0 0
    %1094 = vmatpush1.bf16.msra.mxu0 0
    %1095 = vmatprep.subr.bf16.mxu0 0
    %1096 = vmatpush1.bf16.msra.mxu0 0
    %1097 = vmatprep.subr.bf16.mxu0 0
    %1098 = vmatpush1.bf16.msra.mxu0 0
    %1099 = vmatprep.subr.bf16.mxu0 0
    %1100 = vmatpush1.bf16.msra.mxu0 0
    %1101 = vmatprep.subr.bf16.mxu0 0
    %1102 = vmatpush1.bf16.msra.mxu0 0
    %1103 = vmatprep.subr.bf16.mxu0 0
    %1104 = vmatpush1.bf16.msra.mxu0 0
    %1105 = vmatprep.subr.bf16.mxu0 0
    %1106 = vmatpush1.bf16.msra.mxu0 0
    %1107 = vmatprep.subr.bf16.mxu0 0
    %1108 = vmatpush1.bf16.msra.mxu0 0
    %1109 = vmatprep.subr.bf16.mxu0 0
    %1110 = vmatpush1.bf16.msra.mxu0 0
    %1111 = vmatprep.mubr.bf16.mxu0 0
    %1112 = vmatmul.mubr.bf16.gmra.mrb[0].mxu0 %v1077
    %v1113 = vpop.f32.mrb[0].mxu0
    %v1114 = vadd.f32 0.0, %v1113
    %v1115 = vpop.f32.mrb[0].mxu0
    %v1116 = vpop.f32.mrb[0].mxu0
    %v1117 = vpop.f32.mrb[0].mxu0
    %1118 = vdwg.mxu0
    %v1119 = vadd.f32 %v1073, %v1114
    %v1120 = vxor.u32 %v1071, 2147483648
    %v1121 = vmul.f32 %v1120, 1.442695
    %v1122 = vpow.pop %v1121
    %v1123 = vadd.f32 %v1122, 1.0
    %v1124 = vrcp.pop %v1123
    %v1125 = vmul.f32 1.0, %v1124
    %v1126 = vtanh.pop %v1071
    %v1127 = vmul.f32 %v1125, %v975
    %1129 = vrot.lane.b32.xlu0 %v1126, 64
    %v1130 = vpop.permute.xlu0 %1129
    %v1132 = vmul.f32 %v1125, %v1130
    %1134 = vrot.lane.b32.xlu0 %v1132, 32
    %v1135 = vpop.permute.xlu0 %1134
    %v1137 = vadd.f32 %v1127, %v1135
    %v1138 = vtanh.pop %v1137
    %1140 = vrot.lane.b32.xlu0 %v1138, 64
    %v1141 = vpop.permute.xlu0 %1140
    %v1143 = vmul.f32 %v1125, %v1141
    %v1144 = vxor.u32 %v1119, 2147483648
    %v1145 = vmul.f32 %v1144, 1.442695
    %v1146 = vpow.pop %v1145
    %v1147 = vadd.f32 %v1146, 1.0
    %v1148 = vrcp.pop %v1147
    %v1149 = vmul.f32 1.0, %v1148
    %v1150 = vtanh.pop %v1119
    %v1151 = vmul.f32 %v1149, %v999
    %1153 = vrot.lane.b32.xlu0 %v1150, 64
    %v1154 = vpop.permute.xlu0 %1153
    %v1156 = vmul.f32 %v1149, %v1154
    %1158 = vrot.lane.b32.xlu0 %v1156, 32
    %v1159 = vpop.permute.xlu0 %1158
    %v1161 = vadd.f32 %v1151, %v1159
    %v1162 = vtanh.pop %v1161
    %1164 = vrot.lane.b32.xlu0 %v1162, 64
    %v1165 = vpop.permute.xlu0 %1164
    %v1167 = vmul.f32 %v1149, %v1165
    %v1168 = vpack.c.bf16 %v1143, %v1143
    %v1170 = vunpack.c.l.b16 %v1168
    %v1171 = vpack.c.b16 %v1170, %v1170
    %1172 = vrot.lane.b32.xlu0 %v1171, 32
    %v1173 = vpop.permute.xlu0 %1172
    %s1175 = scalar_lea.vmem [#allocation8], 16
    %1176 = vst.msk [vmem:[%s1175] sm:$0xf] %vm527, %v1173
    %v1177 = vpack.c.bf16 %v1167, %v1167
    %v1179 = vunpack.c.l.b16 %v1177
    %v1180 = vpack.c.b16 %v1179, %v1179
    %1181 = vrot.lane.b32.xlu0 %v1180, 32
    %v1182 = vpop.permute.xlu0 %1181
    %s1184 = scalar_lea.vmem [#allocation10], 12
    %1185 = vst.msk [vmem:[%s1184] sm:$0xf] %vm527, %v1182
    %s1186 = scalar_lea.vmem [#allocation6], 40
    %v1187 = vld [vmem:[%s1186] sm:$0xff]
    %1188 = vrot.lane.b32.xlu0 %v1168, 32
    %v1189 = vpop.permute.xlu0 %1188
    %v1191 = vsel %vm360, %v1189, 0
    %1193 = vmatprep.subr.bf16.mxu0 0
    %1194 = vmatpush1.bf16.msra.mxu0 %v356
    %1195 = vmatprep.subr.bf16.mxu0 0
    %1196 = vmatpush1.bf16.msra.mxu0 %v357
    %1197 = vmatprep.subr.bf16.mxu0 0
    %1198 = vmatpush1.bf16.msra.mxu0 0
    %1199 = vmatprep.subr.bf16.mxu0 0
    %1200 = vmatpush1.bf16.msra.mxu0 0
    %1201 = vmatprep.subr.bf16.mxu0 0
    %1202 = vmatpush1.bf16.msra.mxu0 0
    %1203 = vmatprep.subr.bf16.mxu0 0
    %1204 = vmatpush1.bf16.msra.mxu0 0
    %1205 = vmatprep.subr.bf16.mxu0 0
    %1206 = vmatpush1.bf16.msra.mxu0 0
    %1207 = vmatprep.subr.bf16.mxu0 0
    %1208 = vmatpush1.bf16.msra.mxu0 0
    %1209 = vmatprep.subr.bf16.mxu0 0
    %1210 = vmatpush1.bf16.msra.mxu0 0
    %1211 = vmatprep.subr.bf16.mxu0 0
    %1212 = vmatpush1.bf16.msra.mxu0 0
    %1213 = vmatprep.subr.bf16.mxu0 0
    %1214 = vmatpush1.bf16.msra.mxu0 0
    %1215 = vmatprep.subr.bf16.mxu0 0
    %1216 = vmatpush1.bf16.msra.mxu0 0
    %1217 = vmatprep.subr.bf16.mxu0 0
    %1218 = vmatpush1.bf16.msra.mxu0 0
    %1219 = vmatprep.subr.bf16.mxu0 0
    %1220 = vmatpush1.bf16.msra.mxu0 0
    %1221 = vmatprep.subr.bf16.mxu0 0
    %1222 = vmatpush1.bf16.msra.mxu0 0
    %1223 = vmatprep.subr.bf16.mxu0 0
    %1224 = vmatpush1.bf16.msra.mxu0 0
    %1225 = vmatprep.mubr.bf16.mxu0 0
    %1226 = vmatmul.mubr.bf16.gmra.mrb[0].mxu0 %v1191
    %v1227 = vpop.f32.mrb[0].mxu0
    %v1228 = vadd.f32 0.0, %v1227
    %v1229 = vpop.f32.mrb[0].mxu0
    %v1230 = vpop.f32.mrb[0].mxu0
    %v1231 = vpop.f32.mrb[0].mxu0
    %1232 = vdwg.mxu0
    %v1233 = vadd.f32 %v1187, %v1228
    %s1234 = scalar_lea.vmem [#allocation7], 16
    %v1235 = vld [vmem:[%s1234] sm:$0xff]
    %1236 = vrot.lane.b32.xlu0 %v1177, 32
    %v1237 = vpop.permute.xlu0 %1236
    %v1239 = vsel %vm360, %v1237, 0
    %1241 = vmatprep.subr.bf16.mxu0 0
    %1242 = vmatpush1.bf16.msra.mxu0 %v416
    %1243 = vmatprep.subr.bf16.mxu0 0
    %1244 = vmatpush1.bf16.msra.mxu0 %v417
    %1245 = vmatprep.subr.bf16.mxu0 0
    %1246 = vmatpush1.bf16.msra.mxu0 0
    %1247 = vmatprep.subr.bf16.mxu0 0
    %1248 = vmatpush1.bf16.msra.mxu0 0
    %1249 = vmatprep.subr.bf16.mxu0 0
    %1250 = vmatpush1.bf16.msra.mxu0 0
    %1251 = vmatprep.subr.bf16.mxu0 0
    %1252 = vmatpush1.bf16.msra.mxu0 0
    %1253 = vmatprep.subr.bf16.mxu0 0
    %1254 = vmatpush1.bf16.msra.mxu0 0
    %1255 = vmatprep.subr.bf16.mxu0 0
    %1256 = vmatpush1.bf16.msra.mxu0 0
    %1257 = vmatprep.subr.bf16.mxu0 0
    %1258 = vmatpush1.bf16.msra.mxu0 0
    %1259 = vmatprep.subr.bf16.mxu0 0
    %1260 = vmatpush1.bf16.msra.mxu0 0
    %1261 = vmatprep.subr.bf16.mxu0 0
    %1262 = vmatpush1.bf16.msra.mxu0 0
    %1263 = vmatprep.subr.bf16.mxu0 0
    %1264 = vmatpush1.bf16.msra.mxu0 0
    %1265 = vmatprep.subr.bf16.mxu0 0
    %1266 = vmatpush1.bf16.msra.mxu0 0
    %1267 = vmatprep.subr.bf16.mxu0 0
    %1268 = vmatpush1.bf16.msra.mxu0 0
    %1269 = vmatprep.subr.bf16.mxu0 0
    %1270 = vmatpush1.bf16.msra.mxu0 0
    %1271 = vmatprep.subr.bf16.mxu0 0
    %1272 = vmatpush1.bf16.msra.mxu0 0
    %1273 = vmatprep.mubr.bf16.mxu0 0
    %1274 = vmatmul.mubr.bf16.gmra.mrb[0].mxu0 %v1239
    %v1275 = vpop.f32.mrb[0].mxu0
    %v1276 = vadd.f32 0.0, %v1275
    %v1277 = vpop.f32.mrb[0].mxu0
    %v1278 = vpop.f32.mrb[0].mxu0
    %v1279 = vpop.f32.mrb[0].mxu0
    %1280 = vdwg.mxu0
    %v1281 = vadd.f32 %v1235, %v1276
    %v1282 = vxor.u32 %v1233, 2147483648
    %v1283 = vmul.f32 %v1282, 1.442695
    %v1284 = vpow.pop %v1283
    %v1285 = vadd.f32 %v1284, 1.0
    %v1286 = vrcp.pop %v1285
    %v1287 = vmul.f32 1.0, %v1286
    %v1288 = vtanh.pop %v1233
    %v1289 = vmul.f32 %v1287, %v1137
    %1291 = vrot.lane.b32.xlu0 %v1288, 64
    %v1292 = vpop.permute.xlu0 %1291
    %v1294 = vmul.f32 %v1287, %v1292
    %1296 = vrot.lane.b32.xlu0 %v1294, 32
    %v1297 = vpop.permute.xlu0 %1296
    %v1299 = vadd.f32 %v1289, %v1297
    %v1300 = vtanh.pop %v1299
    %1302 = vrot.lane.b32.xlu0 %v1300, 64
    %v1303 = vpop.permute.xlu0 %1302
    %v1305 = vmul.f32 %v1287, %v1303
    %v1306 = vxor.u32 %v1281, 2147483648
    %v1307 = vmul.f32 %v1306, 1.442695
    %v1308 = vpow.pop %v1307
    %v1309 = vadd.f32 %v1308, 1.0
    %v1310 = vrcp.pop %v1309
    %v1311 = vmul.f32 1.0, %v1310
    %v1312 = vtanh.pop %v1281
    %v1313 = vmul.f32 %v1311, %v1161
    %1315 = vrot.lane.b32.xlu0 %v1312, 64
    %v1316 = vpop.permute.xlu0 %1315
    %v1318 = vmul.f32 %v1311, %v1316
    %1320 = vrot.lane.b32.xlu0 %v1318, 32
    %v1321 = vpop.permute.xlu0 %1320
    %v1323 = vadd.f32 %v1313, %v1321
    %v1324 = vtanh.pop %v1323
    %1326 = vrot.lane.b32.xlu0 %v1324, 64
    %v1327 = vpop.permute.xlu0 %1326
    %v1329 = vmul.f32 %v1311, %v1327
    %v1330 = vpack.c.bf16 %v1305, %v1305
    %v1332 = vunpack.c.l.b16 %v1330
    %v1333 = vpack.c.b16 %v1332, %v1332
    %1334 = vrot.lane.b32.xlu0 %v1333, 32
    %v1335 = vpop.permute.xlu0 %1334
    %s1337 = scalar_lea.vmem [#allocation8], 20
    %1338 = vst.msk [vmem:[%s1337] sm:$0xf] %vm527, %v1335
    %v1339 = vpack.c.bf16 %v1329, %v1329
    %v1341 = vunpack.c.l.b16 %v1339
    %v1342 = vpack.c.b16 %v1341, %v1341
    %1343 = vrot.lane.b32.xlu0 %v1342, 32
    %v1344 = vpop.permute.xlu0 %1343
    %s1346 = scalar_lea.vmem [#allocation10], 8
    %1347 = vst.msk [vmem:[%s1346] sm:$0xf] %vm527, %v1344
    %s1348 = scalar_lea.vmem [#allocation6], 48
    %v1349 = vld [vmem:[%s1348] sm:$0xff]
    %1350 = vrot.lane.b32.xlu0 %v1330, 32
    %v1351 = vpop.permute.xlu0 %1350
    %v1353 = vsel %vm360, %v1351, 0
    %1355 = vmatprep.subr.bf16.mxu0 0
    %1356 = vmatpush1.bf16.msra.mxu0 %v356
    %1357 = vmatprep.subr.bf16.mxu0 0
    %1358 = vmatpush1.bf16.msra.mxu0 %v357
    %1359 = vmatprep.subr.bf16.mxu0 0
    %1360 = vmatpush1.bf16.msra.mxu0 0
    %1361 = vmatprep.subr.bf16.mxu0 0
    %1362 = vmatpush1.bf16.msra.mxu0 0
    %1363 = vmatprep.subr.bf16.mxu0 0
    %1364 = vmatpush1.bf16.msra.mxu0 0
    %1365 = vmatprep.subr.bf16.mxu0 0
    %1366 = vmatpush1.bf16.msra.mxu0 0
    %1367 = vmatprep.subr.bf16.mxu0 0
    %1368 = vmatpush1.bf16.msra.mxu0 0
    %1369 = vmatprep.subr.bf16.mxu0 0
    %1370 = vmatpush1.bf16.msra.mxu0 0
    %1371 = vmatprep.subr.bf16.mxu0 0
    %1372 = vmatpush1.bf16.msra.mxu0 0
    %1373 = vmatprep.subr.bf16.mxu0 0
    %1374 = vmatpush1.bf16.msra.mxu0 0
    %1375 = vmatprep.subr.bf16.mxu0 0
    %1376 = vmatpush1.bf16.msra.mxu0 0
    %1377 = vmatprep.subr.bf16.mxu0 0
    %1378 = vmatpush1.bf16.msra.mxu0 0
    %1379 = vmatprep.subr.bf16.mxu0 0
    %1380 = vmatpush1.bf16.msra.mxu0 0
    %1381 = vmatprep.subr.bf16.mxu0 0
    %1382 = vmatpush1.bf16.msra.mxu0 0
    %1383 = vmatprep.subr.bf16.mxu0 0
    %1384 = vmatpush1.bf16.msra.mxu0 0
    %1385 = vmatprep.subr.bf16.mxu0 0
    %1386 = vmatpush1.bf16.msra.mxu0 0
    %1387 = vmatprep.mubr.bf16.mxu0 0
    %1388 = vmatmul.mubr.bf16.gmra.mrb[0].mxu0 %v1353
    %v1389 = vpop.f32.mrb[0].mxu0
    %v1390 = vadd.f32 0.0, %v1389
    %v1391 = vpop.f32.mrb[0].mxu0
    %v1392 = vpop.f32.mrb[0].mxu0
    %v1393 = vpop.f32.mrb[0].mxu0
    %1394 = vdwg.mxu0
    %v1395 = vadd.f32 %v1349, %v1390
    %s1396 = scalar_lea.vmem [#allocation7], 8
    %v1397 = vld [vmem:[%s1396] sm:$0xff]
    %1398 = vrot.lane.b32.xlu0 %v1339, 32
    %v1399 = vpop.permute.xlu0 %1398
    %v1401 = vsel %vm360, %v1399, 0
    %1403 = vmatprep.subr.bf16.mxu0 0
    %1404 = vmatpush1.bf16.msra.mxu0 %v416
    %1405 = vmatprep.subr.bf16.mxu0 0
    %1406 = vmatpush1.bf16.msra.mxu0 %v417
    %1407 = vmatprep.subr.bf16.mxu0 0
    %1408 = vmatpush1.bf16.msra.mxu0 0
    %1409 = vmatprep.subr.bf16.mxu0 0
    %1410 = vmatpush1.bf16.msra.mxu0 0
    %1411 = vmatprep.subr.bf16.mxu0 0
    %1412 = vmatpush1.bf16.msra.mxu0 0
    %1413 = vmatprep.subr.bf16.mxu0 0
    %1414 = vmatpush1.bf16.msra.mxu0 0
    %1415 = vmatprep.subr.bf16.mxu0 0
    %1416 = vmatpush1.bf16.msra.mxu0 0
    %1417 = vmatprep.subr.bf16.mxu0 0
    %1418 = vmatpush1.bf16.msra.mxu0 0
    %1419 = vmatprep.subr.bf16.mxu0 0
    %1420 = vmatpush1.bf16.msra.mxu0 0
    %1421 = vmatprep.subr.bf16.mxu0 0
    %1422 = vmatpush1.bf16.msra.mxu0 0
    %1423 = vmatprep.subr.bf16.mxu0 0
    %1424 = vmatpush1.bf16.msra.mxu0 0
    %1425 = vmatprep.subr.bf16.mxu0 0
    %1426 = vmatpush1.bf16.msra.mxu0 0
    %1427 = vmatprep.subr.bf16.mxu0 0
    %1428 = vmatpush1.bf16.msra.mxu0 0
    %1429 = vmatprep.subr.bf16.mxu0 0
    %1430 = vmatpush1.bf16.msra.mxu0 0
    %1431 = vmatprep.subr.bf16.mxu0 0
    %1432 = vmatpush1.bf16.msra.mxu0 0
    %1433 = vmatprep.subr.bf16.mxu0 0
    %1434 = vmatpush1.bf16.msra.mxu0 0
    %1435 = vmatprep.mubr.bf16.mxu0 0
    %1436 = vmatmul.mubr.bf16.gmra.mrb[0].mxu0 %v1401
    %v1437 = vpop.f32.mrb[0].mxu0
    %v1438 = vadd.f32 0.0, %v1437
    %v1439 = vpop.f32.mrb[0].mxu0
    %v1440 = vpop.f32.mrb[0].mxu0
    %v1441 = vpop.f32.mrb[0].mxu0
    %1442 = vdwg.mxu0
    %v1443 = vadd.f32 %v1397, %v1438
    %v1444 = vxor.u32 %v1395, 2147483648
    %v1445 = vmul.f32 %v1444, 1.442695
    %v1446 = vpow.pop %v1445
    %v1447 = vadd.f32 %v1446, 1.0
    %v1448 = vrcp.pop %v1447
    %v1449 = vmul.f32 1.0, %v1448
    %v1450 = vtanh.pop %v1395
    %v1451 = vmul.f32 %v1449, %v1299
    %1453 = vrot.lane.b32.xlu0 %v1450, 64
    %v1454 = vpop.permute.xlu0 %1453
    %v1456 = vmul.f32 %v1449, %v1454
    %1458 = vrot.lane.b32.xlu0 %v1456, 32
    %v1459 = vpop.permute.xlu0 %1458
    %v1461 = vadd.f32 %v1451, %v1459
    %v1462 = vtanh.pop %v1461
    %1464 = vrot.lane.b32.xlu0 %v1462, 64
    %v1465 = vpop.permute.xlu0 %1464
    %v1467 = vmul.f32 %v1449, %v1465
    %v1468 = vxor.u32 %v1443, 2147483648
    %v1469 = vmul.f32 %v1468, 1.442695
    %v1470 = vpow.pop %v1469
    %v1471 = vadd.f32 %v1470, 1.0
    %v1472 = vrcp.pop %v1471
    %v1473 = vmul.f32 1.0, %v1472
    %v1474 = vtanh.pop %v1443
    %v1475 = vmul.f32 %v1473, %v1323
    %1477 = vrot.lane.b32.xlu0 %v1474, 64
    %v1478 = vpop.permute.xlu0 %1477
    %v1480 = vmul.f32 %v1473, %v1478
    %1482 = vrot.lane.b32.xlu0 %v1480, 32
    %v1483 = vpop.permute.xlu0 %1482
    %v1485 = vadd.f32 %v1475, %v1483
    %v1486 = vtanh.pop %v1485
    %1488 = vrot.lane.b32.xlu0 %v1486, 64
    %v1489 = vpop.permute.xlu0 %1488
    %v1491 = vmul.f32 %v1473, %v1489
    %v1492 = vpack.c.bf16 %v1467, %v1467
    %v1494 = vunpack.c.l.b16 %v1492
    %v1495 = vpack.c.b16 %v1494, %v1494
    %1496 = vrot.lane.b32.xlu0 %v1495, 32
    %v1497 = vpop.permute.xlu0 %1496
    %s1499 = scalar_lea.vmem [#allocation8], 24
    %1500 = vst.msk [vmem:[%s1499] sm:$0xf] %vm527, %v1497
    %v1501 = vpack.c.bf16 %v1491, %v1491
    %v1503 = vunpack.c.l.b16 %v1501
    %v1504 = vpack.c.b16 %v1503, %v1503
    %1505 = vrot.lane.b32.xlu0 %v1504, 32
    %v1506 = vpop.permute.xlu0 %1505
    %s1508 = scalar_lea.vmem [#allocation10], 4
    %1509 = vst.msk [vmem:[%s1508] sm:$0xf] %vm527, %v1506
    %s1510 = scalar_lea.vmem [#allocation6], 56
    %v1511 = vld [vmem:[%s1510] sm:$0xff]
    %1512 = vrot.lane.b32.xlu0 %v1492, 32
    %v1513 = vpop.permute.xlu0 %1512
    %v1515 = vsel %vm360, %v1513, 0
    %1517 = vmatprep.subr.bf16.mxu0 0
    %1518 = vmatpush1.bf16.msra.mxu0 %v356
    %1519 = vmatprep.subr.bf16.mxu0 0
    %1520 = vmatpush1.bf16.msra.mxu0 %v357
    %1521 = vmatprep.subr.bf16.mxu0 0
    %1522 = vmatpush1.bf16.msra.mxu0 0
    %1523 = vmatprep.subr.bf16.mxu0 0
    %1524 = vmatpush1.bf16.msra.mxu0 0
    %1525 = vmatprep.subr.bf16.mxu0 0
    %1526 = vmatpush1.bf16.msra.mxu0 0
    %1527 = vmatprep.subr.bf16.mxu0 0
    %1528 = vmatpush1.bf16.msra.mxu0 0
    %1529 = vmatprep.subr.bf16.mxu0 0
    %1530 = vmatpush1.bf16.msra.mxu0 0
    %1531 = vmatprep.subr.bf16.mxu0 0
    %1532 = vmatpush1.bf16.msra.mxu0 0
    %1533 = vmatprep.subr.bf16.mxu0 0
    %1534 = vmatpush1.bf16.msra.mxu0 0
    %1535 = vmatprep.subr.bf16.mxu0 0
    %1536 = vmatpush1.bf16.msra.mxu0 0
    %1537 = vmatprep.subr.bf16.mxu0 0
    %1538 = vmatpush1.bf16.msra.mxu0 0
    %1539 = vmatprep.subr.bf16.mxu0 0
    %1540 = vmatpush1.bf16.msra.mxu0 0
    %1541 = vmatprep.subr.bf16.mxu0 0
    %1542 = vmatpush1.bf16.msra.mxu0 0
    %1543 = vmatprep.subr.bf16.mxu0 0
    %1544 = vmatpush1.bf16.msra.mxu0 0
    %1545 = vmatprep.subr.bf16.mxu0 0
    %1546 = vmatpush1.bf16.msra.mxu0 0
    %1547 = vmatprep.subr.bf16.mxu0 0
    %1548 = vmatpush1.bf16.msra.mxu0 0
    %1549 = vmatprep.mubr.bf16.mxu0 0
    %1550 = vmatmul.mubr.bf16.gmra.mrb[0].mxu0 %v1515
    %v1551 = vpop.f32.mrb[0].mxu0
    %v1552 = vadd.f32 0.0, %v1551
    %v1553 = vpop.f32.mrb[0].mxu0
    %v1554 = vpop.f32.mrb[0].mxu0
    %v1555 = vpop.f32.mrb[0].mxu0
    %1556 = vdwg.mxu0
    %v1557 = vadd.f32 %v1511, %v1552
    %v1558 = vld [vmem:[#allocation7] sm:$0xff]
    %1559 = vrot.lane.b32.xlu0 %v1501, 32
    %v1560 = vpop.permute.xlu0 %1559
    %v1562 = vsel %vm360, %v1560, 0
    %1564 = vmatprep.subr.bf16.mxu0 0
    %1565 = vmatpush1.bf16.msra.mxu0 %v416
    %1566 = vmatprep.subr.bf16.mxu0 0
    %1567 = vmatpush1.bf16.msra.mxu0 %v417
    %1568 = vmatprep.subr.bf16.mxu0 0
    %1569 = vmatpush1.bf16.msra.mxu0 0
    %1570 = vmatprep.subr.bf16.mxu0 0
    %1571 = vmatpush1.bf16.msra.mxu0 0
    %1572 = vmatprep.subr.bf16.mxu0 0
    %1573 = vmatpush1.bf16.msra.mxu0 0
    %1574 = vmatprep.subr.bf16.mxu0 0
    %1575 = vmatpush1.bf16.msra.mxu0 0
    %1576 = vmatprep.subr.bf16.mxu0 0
    %1577 = vmatpush1.bf16.msra.mxu0 0
    %1578 = vmatprep.subr.bf16.mxu0 0
    %1579 = vmatpush1.bf16.msra.mxu0 0
    %1580 = vmatprep.subr.bf16.mxu0 0
    %1581 = vmatpush1.bf16.msra.mxu0 0
    %1582 = vmatprep.subr.bf16.mxu0 0
    %1583 = vmatpush1.bf16.msra.mxu0 0
    %1584 = vmatprep.subr.bf16.mxu0 0
    %1585 = vmatpush1.bf16.msra.mxu0 0
    %1586 = vmatprep.subr.bf16.mxu0 0
    %1587 = vmatpush1.bf16.msra.mxu0 0
    %1588 = vmatprep.subr.bf16.mxu0 0
    %1589 = vmatpush1.bf16.msra.mxu0 0
    %1590 = vmatprep.subr.bf16.mxu0 0
    %1591 = vmatpush1.bf16.msra.mxu0 0
    %1592 = vmatprep.subr.bf16.mxu0 0
    %1593 = vmatpush1.bf16.msra.mxu0 0
    %1594 = vmatprep.subr.bf16.mxu0 0
    %1595 = vmatpush1.bf16.msra.mxu0 0
    %1596 = vmatprep.mubr.bf16.mxu0 0
    %1597 = vmatmul.mubr.bf16.gmra.mrb[0].mxu0 %v1562
    %v1598 = vpop.f32.mrb[0].mxu0
    %v1599 = vadd.f32 0.0, %v1598
    %v1600 = vpop.f32.mrb[0].mxu0
    %v1601 = vpop.f32.mrb[0].mxu0
    %v1602 = vpop.f32.mrb[0].mxu0
    %1603 = vdwg.mxu0
    %v1604 = vadd.f32 %v1558, %v1599
    %v1605 = vxor.u32 %v1557, 2147483648
    %v1606 = vmul.f32 %v1605, 1.442695
    %v1607 = vpow.pop %v1606
    %v1608 = vadd.f32 %v1607, 1.0
    %v1609 = vrcp.pop %v1608
    %v1610 = vmul.f32 1.0, %v1609
    %v1611 = vtanh.pop %v1557
    %v1612 = vmul.f32 %v1610, %v1461
    %1614 = vrot.lane.b32.xlu0 %v1611, 64
    %v1615 = vpop.permute.xlu0 %1614
    %v1617 = vmul.f32 %v1610, %v1615
    %1619 = vrot.lane.b32.xlu0 %v1617, 32
    %v1620 = vpop.permute.xlu0 %1619
    %v1622 = vadd.f32 %v1612, %v1620
    %v1623 = vtanh.pop %v1622
    %1625 = vrot.lane.b32.xlu0 %v1623, 64
    %v1626 = vpop.permute.xlu0 %1625
    %v1628 = vmul.f32 %v1610, %v1626
    %v1629 = vxor.u32 %v1604, 2147483648
    %v1630 = vmul.f32 %v1629, 1.442695
    %v1631 = vpow.pop %v1630
    %v1632 = vadd.f32 %v1631, 1.0
    %v1633 = vrcp.pop %v1632
    %v1634 = vmul.f32 1.0, %v1633
    %v1635 = vtanh.pop %v1604
    %v1636 = vmul.f32 %v1634, %v1485
    %1638 = vrot.lane.b32.xlu0 %v1635, 64
    %v1639 = vpop.permute.xlu0 %1638
    %v1641 = vmul.f32 %v1634, %v1639
    %1643 = vrot.lane.b32.xlu0 %v1641, 32
    %v1644 = vpop.permute.xlu0 %1643
    %v1646 = vadd.f32 %v1636, %v1644
    %v1647 = vtanh.pop %v1646
    %1649 = vrot.lane.b32.xlu0 %v1647, 64
    %v1650 = vpop.permute.xlu0 %1649
    %v1652 = vmul.f32 %v1634, %v1650
    %v1653 = vpack.c.bf16 %v1628, %v1628
    %v1655 = vunpack.c.l.b16 %v1653
    %v1656 = vpack.c.b16 %v1655, %v1655
    %1657 = vrot.lane.b32.xlu0 %v1656, 32
    %v1658 = vpop.permute.xlu0 %1657
    %s1660 = scalar_lea.vmem [#allocation8], 28
    %1661 = vst.msk [vmem:[%s1660] sm:$0xf] %vm527, %v1658
    %v1662 = vpack.c.bf16 %v1652, %v1652
    %v1664 = vunpack.c.l.b16 %v1662
    %v1665 = vpack.c.b16 %v1664, %v1664
    %1666 = vrot.lane.b32.xlu0 %v1665, 32
    %v1667 = vpop.permute.xlu0 %1666
    %1669 = vst.msk [vmem:[#allocation10] sm:$0xf] %vm527, %v1667
    %1671 = vrot.lane.b32.xlu0 %v1628, 32
    %v1672 = vpop.permute.xlu0 %1671
    %1674 = vst.msk [vmem:[#allocation2] sm:$0xff] %vm360, %v1672
    %1676 = vrot.lane.b32.xlu0 %v1622, 96
    %v1677 = vpop.permute.xlu0 %1676
    %1679 = vst.msk [vmem:[#allocation3] sm:$0xff] %vm360, %v1677
    %1681 = vrot.lane.b32.xlu0 %v1652, 32
    %v1682 = vpop.permute.xlu0 %1681
    %1684 = vst.msk [vmem:[#allocation4] sm:$0xff] %vm360, %v1682
    %1686 = vrot.lane.b32.xlu0 %v1646, 96
    %v1687 = vpop.permute.xlu0 %1686
    %1689 = vst.msk [vmem:[#allocation5] sm:$0xff] %vm360, %v1687
    // Predicated region
    $region26: #{tpu_custom_call.1} parent=1 // pred_check
      _
    $region27: #{tpu_custom_call.1} parent=1 // pred_check_branch
      %1691 = sbr.rel (0) target = $region29
    $region28: #{tpu_custom_call.1} parent=1 // pred_region
      %s1693 = ssub.s32 512, 512
      %1694 = vsyncadd [#allocation9], %s1693
      %s1695 = sshll.u32 [#allocation8], 4
      %s1696 = int_to_ptr.vmem [resolvable:$true] %s1695
      %1701 = dma.vmem_to_hbm [thread:$0]  %s1696, 512, %s5, [#allocation9], 64, 64, 4
    $region29: #{tpu_custom_call.1} parent=1 // pred_fallthru
      _
    // Predicated region
    $region30: #{tpu_custom_call.1} parent=1 // pred_check
      _
    $region31: #{tpu_custom_call.1} parent=1 // pred_check_branch
      %1703 = sbr.rel (0) target = $region33
    $region32: #{tpu_custom_call.1} parent=1 // pred_region
      %s1704 = ssub.s32 0, 0
      %s1705 = smul.u32 8, %s1704
      %s1707 = ssub.s32 512, 512
      %1708 = vsyncadd [#allocation11], %s1707
      %s1709 = smul.addr %s1705, 64
      %s1710 = scalar_lea.hbm %s6, %s1709
      %s1711 = sshll.u32 [#allocation10], 4
      %s1712 = int_to_ptr.vmem [resolvable:$true] %s1711
      %1717 = dma.vmem_to_hbm [thread:$0]  %s1712, 512, %s1710, [#allocation11], 64, 64, 4
    $region33: #{tpu_custom_call.1} parent=1 // pred_fallthru
      _
    // Predicated region
    $region34: #{tpu_custom_call.1} parent=1 // pred_check
      _
    $region35: #{tpu_custom_call.1} parent=1 // pred_check_branch
      %1719 = sbr.rel (0) target = $region37
    $region36: #{tpu_custom_call.1} parent=1 // pred_region
      %1720 = dma.done [#allocation9], 512
    $region37: #{tpu_custom_call.1} parent=1 // pred_fallthru
      _
    // Predicated region
    $region38: #{tpu_custom_call.1} parent=1 // pred_check
      _
    $region39: #{tpu_custom_call.1} parent=1 // pred_check_branch
      %1722 = sbr.rel (0) target = $region41
    $region40: #{tpu_custom_call.1} parent=1 // pred_region
      %1723 = dma.done [#allocation11], 512
    $region41: #{tpu_custom_call.1} parent=1 // pred_fallthru
      _
    %1724 = vsyncpa [#allocation9], 1
    %1725 = vsyncpa [#allocation11], 1

</llo_original>
